<compile_context>
chip_gen: v7x
topology: tpu7x:2x2x1
jax: 0.10.0
libtpu: 0.0.40
codegen_flags: <defaults>
</compile_context>

<pallas_src>
import jax
import jax.numpy as jnp
from jax import lax
from jax.experimental import pallas as pl
from jax.experimental.pallas import tpu as pltpu

T_REDUCE = 8                   # OneSpike T_reduce (number of chunks / parallel spike copies)
CLP_MAX = 2.0                  # Clp_max
THETA = CLP_MAX - 0.001        # threshold used by get_spike / getSpikes


def _floor_mod(v, m):
    # torch.remainder semantics for a positive compile-time-constant divisor m (result in
    # [0, m)); the divide is replaced by a multiply with the precomputed reciprocal.
    return v - m * jnp.floor(v * (1.0 / m))


def _repvgg_kernel(x_ref, w_ref, b_ref, o_ref, xpad_ref):
    # x_ref   : (T, H, W, Cin)       bf16  input spikes for one batch element (channels-last)
    # w_ref   : (9, Cin, Cout)       bf16  3x3 conv weight, taps ordered (kh, kw)
    # b_ref   : (1, Cout)            f32   conv bias
    # o_ref   : (T, H*W, Cout)       bf16  output spikes (written with one bulk store)
    # xpad_ref: (Tc, H+2, W+2, Cin)  f32   VMEM scratch: zero-padded chunk mean
    T, H, W, Cin = x_ref.shape
    Tc = T // T_REDUCE
    Cout = o_ref.shape[-1]
    S = H * W

    # ---- chunk mean: mean_i(conv(x_i)) == conv(mean_i(x_i))  (conv is linear) ----------
    xr = x_ref[...].astype(jnp.float32).reshape(T_REDUCE, Tc, H, W, Cin)
    xm = xr[0]
    for i in range(1, T_REDUCE):
        xm = xm + xr[i]
    xm = xm * (1.0 / T_REDUCE)                                    # (Tc, H, W, Cin) f32

    # ---- padding=1 halo built in-kernel (no wrapper-side jnp.pad pass over HBM) ---------
    xpad_ref[...] = jnp.zeros_like(xpad_ref)
    xpad_ref[:, 1:H + 1, 1:W + 1, :] = xm

    # ---- 3x3 / stride-1 conv: 9 shifted MXU matmuls into a flat 2-D f32 accumulator -----
    wf = w_ref[...]                                               # (9, Cin, Cout) bf16
    acc = jnp.zeros((Tc * S, Cout), jnp.float32)
    for kh in range(3):
        for kw in range(3):
            patch = xpad_ref[:, kh:kh + H, kw:kw + W, :]          # (Tc, H, W, Cin) f32
            patch = patch.reshape(Tc * S, Cin).astype(jnp.bfloat16)
            acc = acc + lax.dot_general(
                patch, wf[kh * 3 + kw],
                (((1,), (0,)), ((), ())),
                preferred_element_type=jnp.float32)
    x_out = (acc + b_ref[...]).reshape(Tc, S, Cout)               # (Tc, H*W, Cout) f32

    # ---- get_spike(x_out, Clp_max, T_reduce): all T_REDUCE copies vectorized; only the
    # soft-reset recurrence over tc (the in-chunk time axis) is sequential. ---------------
    u = jnp.stack(
        [_floor_mod(float(i) * x_out, THETA) + x_out for i in range(T_REDUCE)],
        axis=0)                                                   # (T_REDUCE, Tc, S, Cout)
    nspk = jnp.zeros((T_REDUCE, S, Cout), jnp.float32)
    spikes = []
    for tc in range(Tc):                                          # Tc = T // 8 (small)
        spk = ((u[:, tc] - THETA * nspk) >= THETA).astype(jnp.float32)
        nspk = nspk + spk
        spikes.append(spk)

    # output time index is i*Tc + tc (torch.cat of the T_REDUCE spike copies along time)
    if Tc == 1:
        o_ref[...] = spikes[0].astype(o_ref.dtype)                # single bulk store
    else:
        for tc in range(Tc):
            o_ref[pl.ds(tc, T_REDUCE, stride=Tc)] = spikes[tc].astype(o_ref.dtype)


@jax.jit
def repvggplus_block_forward(x, weight, bias):
    """Deploy-mode RepVGGplusBlock forward.

    x:      (N, Cin, H, W, T) float with T % T_REDUCE == 0   (PyTorch NCHW+T layout)
    weight: (Cout, Cin, 3, 3, 1)   rbr_reparam conv weight (catSNN Conv3d, kernel-z == 1)
    bias:   (Cout,)
    returns (N, Cout, H, W, T) bfloat16 binary spikes (values are exactly 0/1).
    """
    N, Cin, H, W, T = x.shape
    assert T % T_REDUCE == 0
    Tc = T // T_REDUCE
    Cout = weight.shape[0]
    S = H * W

    # Layout glue for the PyTorch NCHW+T interface only.  In a full OneSpike network the
    # activations stay in this channels-last bf16 (N, T, H, W, C) layout between blocks,
    # making these transposes/casts disappear.
    x_nat = jnp.transpose(x, (0, 4, 2, 3, 1)).astype(jnp.bfloat16)      # (N, T, H, W, Cin)
    w_mat = jnp.transpose(weight[..., 0], (2, 3, 1, 0)).reshape(9, Cin, Cout)
    w_mat = w_mat.astype(jnp.bfloat16)                                  # taps ordered (kh, kw)
    b2 = bias.reshape(1, Cout).astype(jnp.float32)

    # TODO(synk): for production H/W/Cout add an H-tile grid axis (+1-row halo) so the
    # per-batch resident block also fits v7x's 64 MiB VMEM; at these shapes one batch per
    # grid step is far below every generation's limit and minimizes per-step overhead.
    out = pl.pallas_call(
        _repvgg_kernel,
        grid=(N,),
        in_specs=[
            pl.BlockSpec((None, T, H, W, Cin), lambda n: (n, 0, 0, 0, 0)),
            pl.BlockSpec((9, Cin, Cout), lambda n: (0, 0, 0)),
            pl.BlockSpec((1, Cout), lambda n: (0, 0)),
        ],
        out_specs=pl.BlockSpec((None, T, S, Cout), lambda n: (n, 0, 0, 0)),
        out_shape=jax.ShapeDtypeStruct((N, T, S, Cout), jnp.bfloat16),
        scratch_shapes=[pltpu.VMEM((Tc, H + 2, W + 2, Cin), jnp.float32)],
        compiler_params=pltpu.CompilerParams(dimension_semantics=("parallel",)),
    )(x_nat, w_mat, b2)

    out = out.reshape(N, T, H, W, Cout)
    return jnp.transpose(out, (0, 4, 2, 3, 1))                          # (N, Cout, H, W, T)


def _reference_forward(x, weight, bias):
    """Pure-JAX f32 reference with the original op order (per-chunk conv, then mean)."""
    N, Cin, H, W, T = x.shape
    Tc = T // T_REDUCE
    Cout = weight.shape[0]
    w2d = weight[..., 0]
    outs = []
    for c in jnp.split(x, T_REDUCE, axis=-1):
        c2 = jnp.moveaxis(c, -1, 1).reshape(N * Tc, Cin, H, W)
        y = lax.conv_general_dilated(
            c2, w2d, window_strides=(1, 1), padding=((1, 1), (1, 1)),
            dimension_numbers=("NCHW", "OIHW", "NCHW"))
        y = y + bias[None, :, None, None]
        y = jnp.moveaxis(y.reshape(N, Tc, Cout, H, W), 1, -1)           # (N, Cout, H, W, Tc)
        outs.append(y)
    x_out = jnp.mean(jnp.stack(outs, 0), 0)
    spikes = []
    for i in range(T_REDUCE):
        u = _floor_mod(i * x_out, THETA) + x_out
        nspk = jnp.zeros(u.shape[:-1] + (1,), jnp.float32)
        cols = []
        for tc in range(Tc):
            spk = ((u[..., tc:tc + 1] - THETA * nspk) >= THETA).astype(jnp.float32)
            nspk = nspk + spk
            cols.append(spk)
        spikes.append(jnp.concatenate(cols, axis=-1))
    return jnp.concatenate(spikes, axis=-1)                             # (N, Cout, H, W, T)


if __name__ == "__main__":
    key = jax.random.PRNGKey(0)
    kx, kw, kb = jax.random.split(key, 3)
    # small shapes: batch=2, in_channels=4, out_channels=8, spatial 8x8, T = T_reduce = 8
    N, Cin, Cout, H, W, T = 2, 4, 8, 8, 8, T_REDUCE
    # binary spike input (faithful to the SNN and exactly representable in bf16)
    x = (jax.random.uniform(kx, (N, Cin, H, W, T)) < 0.5).astype(jnp.float32)
    # weights snapped to bf16-representable values so the kernel's bf16 MXU path is
    # numerically aligned with the f32 reference (spike outputs are threshold-sensitive)
    weight = jax.random.uniform(kw, (Cout, Cin, 3, 3, 1), jnp.float32) * (4.0 / (Cin * 9))
    weight = weight.astype(jnp.bfloat16).astype(jnp.float32)
    bias = jax.random.uniform(kb, (Cout,), jnp.float32, minval=-0.1, maxval=0.1)

    out = jax.block_until_ready(repvggplus_block_forward(x, weight, bias))
    assert out.shape == (N, Cout, H, W, T), out.shape

    ref = jax.block_until_ready(_reference_forward(x, weight, bias))
    err = float(jnp.mean(jnp.abs(out.astype(jnp.float32) - ref)))
    assert err < 1e-3, err

    print("KERNEL_OK")
</pallas_src>

<mosaic_0001>
module attributes {stable_mosaic.version = 11 : i64} {
  func.func @_repvgg_kernel(%arg0: i32, %arg1: memref<1x8x8x8x4xbf16, #tpu.memory_space<vmem>>, %arg2: memref<9x4x8xbf16, #tpu.memory_space<vmem>>, %arg3: memref<1x8xf32, #tpu.memory_space<vmem>>, %arg4: memref<1x8x64x8xbf16, #tpu.memory_space<vmem>>, %arg5: memref<1x10x10x4xf32, #tpu.memory_space<vmem>>) attributes {dimension_semantics = [#tpu.dimension_semantics<parallel>], iteration_bounds = array<i64: 2>, scalar_prefetch = 0 : i64, scratch_operands = 1 : i64, tpu.core_type = #tpu.core_type<tc>, window_params = [{transform_indices = @transform_0, window_bounds = array<i64: 1, 8, 8, 8, 4>}, {pipeline_mode = #tpu.pipeline_mode<synchronous>, transform_indices = @transform_1, window_bounds = array<i64: 9, 4, 8>}, {pipeline_mode = #tpu.pipeline_mode<synchronous>, transform_indices = @transform_2, window_bounds = array<i64: 1, 8>}, {transform_indices = @transform_3, window_bounds = array<i64: 1, 8, 64, 8>}]} {
    %c0 = arith.constant 0 : index
    %c0_0 = arith.constant 0 : index
    %c0_1 = arith.constant 0 : index
    %c0_2 = arith.constant 0 : index
    %c0_3 = arith.constant 0 : index
    %0 = vector.load %arg1[%c0, %c0_0, %c0_1, %c0_2, %c0_3] : memref<1x8x8x8x4xbf16, #tpu.memory_space<vmem>>, vector<1x8x8x8x4xbf16>
    %1 = vector.shape_cast %0 : vector<1x8x8x8x4xbf16> to vector<8x8x8x4xbf16>
    %2 = arith.extf %1 : vector<8x8x8x4xbf16> to vector<8x8x8x4xf32>
    %3 = vector.shape_cast %2 : vector<8x8x8x4xf32> to vector<8x1x8x8x4xf32>
    %4 = vector.extract_strided_slice %3 {offsets = [0, 0, 0, 0, 0], sizes = [1, 1, 8, 8, 4], strides = [1, 1, 1, 1, 1]} : vector<8x1x8x8x4xf32> to vector<1x1x8x8x4xf32>
    %5 = vector.shape_cast %4 : vector<1x1x8x8x4xf32> to vector<1x8x8x4xf32>
    %6 = vector.extract_strided_slice %3 {offsets = [1, 0, 0, 0, 0], sizes = [1, 1, 8, 8, 4], strides = [1, 1, 1, 1, 1]} : vector<8x1x8x8x4xf32> to vector<1x1x8x8x4xf32>
    %7 = vector.shape_cast %6 : vector<1x1x8x8x4xf32> to vector<1x8x8x4xf32>
    %8 = arith.addf %5, %7 : vector<1x8x8x4xf32>
    %9 = vector.extract_strided_slice %3 {offsets = [2, 0, 0, 0, 0], sizes = [1, 1, 8, 8, 4], strides = [1, 1, 1, 1, 1]} : vector<8x1x8x8x4xf32> to vector<1x1x8x8x4xf32>
    %10 = vector.shape_cast %9 : vector<1x1x8x8x4xf32> to vector<1x8x8x4xf32>
    %11 = arith.addf %8, %10 : vector<1x8x8x4xf32>
    %12 = vector.extract_strided_slice %3 {offsets = [3, 0, 0, 0, 0], sizes = [1, 1, 8, 8, 4], strides = [1, 1, 1, 1, 1]} : vector<8x1x8x8x4xf32> to vector<1x1x8x8x4xf32>
    %13 = vector.shape_cast %12 : vector<1x1x8x8x4xf32> to vector<1x8x8x4xf32>
    %14 = arith.addf %11, %13 : vector<1x8x8x4xf32>
    %15 = vector.extract_strided_slice %3 {offsets = [4, 0, 0, 0, 0], sizes = [1, 1, 8, 8, 4], strides = [1, 1, 1, 1, 1]} : vector<8x1x8x8x4xf32> to vector<1x1x8x8x4xf32>
    %16 = vector.shape_cast %15 : vector<1x1x8x8x4xf32> to vector<1x8x8x4xf32>
    %17 = arith.addf %14, %16 : vector<1x8x8x4xf32>
    %18 = vector.extract_strided_slice %3 {offsets = [5, 0, 0, 0, 0], sizes = [1, 1, 8, 8, 4], strides = [1, 1, 1, 1, 1]} : vector<8x1x8x8x4xf32> to vector<1x1x8x8x4xf32>
    %19 = vector.shape_cast %18 : vector<1x1x8x8x4xf32> to vector<1x8x8x4xf32>
    %20 = arith.addf %17, %19 : vector<1x8x8x4xf32>
    %21 = vector.extract_strided_slice %3 {offsets = [6, 0, 0, 0, 0], sizes = [1, 1, 8, 8, 4], strides = [1, 1, 1, 1, 1]} : vector<8x1x8x8x4xf32> to vector<1x1x8x8x4xf32>
    %22 = vector.shape_cast %21 : vector<1x1x8x8x4xf32> to vector<1x8x8x4xf32>
    %23 = arith.addf %20, %22 : vector<1x8x8x4xf32>
    %24 = vector.extract_strided_slice %3 {offsets = [7, 0, 0, 0, 0], sizes = [1, 1, 8, 8, 4], strides = [1, 1, 1, 1, 1]} : vector<8x1x8x8x4xf32> to vector<1x1x8x8x4xf32>
    %25 = vector.shape_cast %24 : vector<1x1x8x8x4xf32> to vector<1x8x8x4xf32>
    %26 = arith.addf %23, %25 : vector<1x8x8x4xf32>
    %cst = arith.constant 1.250000e-01 : f32
    %27 = vector.broadcast %cst : f32 to vector<1x8x8x4xf32>
    %28 = arith.mulf %26, %27 : vector<1x8x8x4xf32>
    %cst_4 = arith.constant 0.000000e+00 : f32
    %29 = vector.broadcast %cst_4 : f32 to vector<1x10x10x4xf32>
    %c0_5 = arith.constant 0 : index
    %c0_6 = arith.constant 0 : index
    %c0_7 = arith.constant 0 : index
    %c0_8 = arith.constant 0 : index
    %30 = vector.load %arg5[%c0_5, %c0_6, %c0_7, %c0_8] : memref<1x10x10x4xf32, #tpu.memory_space<vmem>>, vector<1x10x10x4xf32>
    tpu.vector_store %arg5[%c0_5, %c0_6, %c0_7, %c0_8], %29 {strides = array<i32>} : memref<1x10x10x4xf32, #tpu.memory_space<vmem>>, vector<1x10x10x4xf32>,
    %c0_9 = arith.constant 0 : index
    %c1 = arith.constant 1 : index
    %c1_10 = arith.constant 1 : index
    %c0_11 = arith.constant 0 : index
    %31 = vector.load %arg5[%c0_9, %c1, %c1_10, %c0_11] : memref<1x10x10x4xf32, #tpu.memory_space<vmem>>, vector<1x8x8x4xf32>
    tpu.vector_store %arg5[%c0_9, %c1, %c1_10, %c0_11], %28 {strides = array<i32>} : memref<1x10x10x4xf32, #tpu.memory_space<vmem>>, vector<1x8x8x4xf32>,
    %c0_12 = arith.constant 0 : index
    %c0_13 = arith.constant 0 : index
    %c0_14 = arith.constant 0 : index
    %32 = vector.load %arg2[%c0_12, %c0_13, %c0_14] : memref<9x4x8xbf16, #tpu.memory_space<vmem>>, vector<9x4x8xbf16>
    %cst_15 = arith.constant 0.000000e+00 : f32
    %33 = vector.broadcast %cst_15 : f32 to vector<64x8xf32>
    %c0_16 = arith.constant 0 : index
    %c0_17 = arith.constant 0 : index
    %c0_18 = arith.constant 0 : index
    %c0_19 = arith.constant 0 : index
    %34 = vector.load %arg5[%c0_16, %c0_17, %c0_18, %c0_19] : memref<1x10x10x4xf32, #tpu.memory_space<vmem>>, vector<1x8x8x4xf32>
    %35 = vector.shape_cast %34 : vector<1x8x8x4xf32> to vector<64x4xf32>
    %36 = arith.truncf %35 : vector<64x4xf32> to vector<64x4xbf16>
    %37 = vector.extract_strided_slice %32 {offsets = [0, 0, 0], sizes = [1, 4, 8], strides = [1, 1, 1]} : vector<9x4x8xbf16> to vector<1x4x8xbf16>
    %38 = vector.shape_cast %37 : vector<1x4x8xbf16> to vector<4x8xbf16>
    %cst_20 = arith.constant dense<0.000000e+00> : vector<64x8xf32>
    %39 = tpu.matmul %36, %38, %cst_20 {dimension_numbers = #tpu.dot_dimension_numbers<[1], [0], [0], [1], [0, 0, 1, 1], [], []>} : vector<64x4xbf16>, vector<4x8xbf16>, vector<64x8xf32> -> vector<64x8xf32>
    %40 = arith.addf %33, %39 : vector<64x8xf32>
    %c0_21 = arith.constant 0 : index
    %c0_22 = arith.constant 0 : index
    %c1_23 = arith.constant 1 : index
    %c0_24 = arith.constant 0 : index
    %41 = vector.load %arg5[%c0_21, %c0_22, %c1_23, %c0_24] : memref<1x10x10x4xf32, #tpu.memory_space<vmem>>, vector<1x8x8x4xf32>
    %42 = vector.shape_cast %41 : vector<1x8x8x4xf32> to vector<64x4xf32>
    %43 = arith.truncf %42 : vector<64x4xf32> to vector<64x4xbf16>
    %44 = vector.extract_strided_slice %32 {offsets = [1, 0, 0], sizes = [1, 4, 8], strides = [1, 1, 1]} : vector<9x4x8xbf16> to vector<1x4x8xbf16>
    %45 = vector.shape_cast %44 : vector<1x4x8xbf16> to vector<4x8xbf16>
    %cst_25 = arith.constant dense<0.000000e+00> : vector<64x8xf32>
    %46 = tpu.matmul %43, %45, %cst_25 {dimension_numbers = #tpu.dot_dimension_numbers<[1], [0], [0], [1], [0, 0, 1, 1], [], []>} : vector<64x4xbf16>, vector<4x8xbf16>, vector<64x8xf32> -> vector<64x8xf32>
    %47 = arith.addf %40, %46 : vector<64x8xf32>
    %c0_26 = arith.constant 0 : index
    %c0_27 = arith.constant 0 : index
    %c2 = arith.constant 2 : index
    %c0_28 = arith.constant 0 : index
    %48 = vector.load %arg5[%c0_26, %c0_27, %c2, %c0_28] : memref<1x10x10x4xf32, #tpu.memory_space<vmem>>, vector<1x8x8x4xf32>
    %49 = vector.shape_cast %48 : vector<1x8x8x4xf32> to vector<64x4xf32>
    %50 = arith.truncf %49 : vector<64x4xf32> to vector<64x4xbf16>
    %51 = vector.extract_strided_slice %32 {offsets = [2, 0, 0], sizes = [1, 4, 8], strides = [1, 1, 1]} : vector<9x4x8xbf16> to vector<1x4x8xbf16>
    %52 = vector.shape_cast %51 : vector<1x4x8xbf16> to vector<4x8xbf16>
    %cst_29 = arith.constant dense<0.000000e+00> : vector<64x8xf32>
    %53 = tpu.matmul %50, %52, %cst_29 {dimension_numbers = #tpu.dot_dimension_numbers<[1], [0], [0], [1], [0, 0, 1, 1], [], []>} : vector<64x4xbf16>, vector<4x8xbf16>, vector<64x8xf32> -> vector<64x8xf32>
    %54 = arith.addf %47, %53 : vector<64x8xf32>
    %c0_30 = arith.constant 0 : index
    %c1_31 = arith.constant 1 : index
    %c0_32 = arith.constant 0 : index
    %c0_33 = arith.constant 0 : index
    %55 = vector.load %arg5[%c0_30, %c1_31, %c0_32, %c0_33] : memref<1x10x10x4xf32, #tpu.memory_space<vmem>>, vector<1x8x8x4xf32>
    %56 = vector.shape_cast %55 : vector<1x8x8x4xf32> to vector<64x4xf32>
    %57 = arith.truncf %56 : vector<64x4xf32> to vector<64x4xbf16>
    %58 = vector.extract_strided_slice %32 {offsets = [3, 0, 0], sizes = [1, 4, 8], strides = [1, 1, 1]} : vector<9x4x8xbf16> to vector<1x4x8xbf16>
    %59 = vector.shape_cast %58 : vector<1x4x8xbf16> to vector<4x8xbf16>
    %cst_34 = arith.constant dense<0.000000e+00> : vector<64x8xf32>
    %60 = tpu.matmul %57, %59, %cst_34 {dimension_numbers = #tpu.dot_dimension_numbers<[1], [0], [0], [1], [0, 0, 1, 1], [], []>} : vector<64x4xbf16>, vector<4x8xbf16>, vector<64x8xf32> -> vector<64x8xf32>
    %61 = arith.addf %54, %60 : vector<64x8xf32>
    %c0_35 = arith.constant 0 : index
    %c1_36 = arith.constant 1 : index
    %c1_37 = arith.constant 1 : index
    %c0_38 = arith.constant 0 : index
    %62 = vector.load %arg5[%c0_35, %c1_36, %c1_37, %c0_38] : memref<1x10x10x4xf32, #tpu.memory_space<vmem>>, vector<1x8x8x4xf32>
    %63 = vector.shape_cast %62 : vector<1x8x8x4xf32> to vector<64x4xf32>
    %64 = arith.truncf %63 : vector<64x4xf32> to vector<64x4xbf16>
    %65 = vector.extract_strided_slice %32 {offsets = [4, 0, 0], sizes = [1, 4, 8], strides = [1, 1, 1]} : vector<9x4x8xbf16> to vector<1x4x8xbf16>
    %66 = vector.shape_cast %65 : vector<1x4x8xbf16> to vector<4x8xbf16>
    %cst_39 = arith.constant dense<0.000000e+00> : vector<64x8xf32>
    %67 = tpu.matmul %64, %66, %cst_39 {dimension_numbers = #tpu.dot_dimension_numbers<[1], [0], [0], [1], [0, 0, 1, 1], [], []>} : vector<64x4xbf16>, vector<4x8xbf16>, vector<64x8xf32> -> vector<64x8xf32>
    %68 = arith.addf %61, %67 : vector<64x8xf32>
    %c0_40 = arith.constant 0 : index
    %c1_41 = arith.constant 1 : index
    %c2_42 = arith.constant 2 : index
    %c0_43 = arith.constant 0 : index
    %69 = vector.load %arg5[%c0_40, %c1_41, %c2_42, %c0_43] : memref<1x10x10x4xf32, #tpu.memory_space<vmem>>, vector<1x8x8x4xf32>
    %70 = vector.shape_cast %69 : vector<1x8x8x4xf32> to vector<64x4xf32>
    %71 = arith.truncf %70 : vector<64x4xf32> to vector<64x4xbf16>
    %72 = vector.extract_strided_slice %32 {offsets = [5, 0, 0], sizes = [1, 4, 8], strides = [1, 1, 1]} : vector<9x4x8xbf16> to vector<1x4x8xbf16>
    %73 = vector.shape_cast %72 : vector<1x4x8xbf16> to vector<4x8xbf16>
    %cst_44 = arith.constant dense<0.000000e+00> : vector<64x8xf32>
    %74 = tpu.matmul %71, %73, %cst_44 {dimension_numbers = #tpu.dot_dimension_numbers<[1], [0], [0], [1], [0, 0, 1, 1], [], []>} : vector<64x4xbf16>, vector<4x8xbf16>, vector<64x8xf32> -> vector<64x8xf32>
    %75 = arith.addf %68, %74 : vector<64x8xf32>
    %c0_45 = arith.constant 0 : index
    %c2_46 = arith.constant 2 : index
    %c0_47 = arith.constant 0 : index
    %c0_48 = arith.constant 0 : index
    %76 = vector.load %arg5[%c0_45, %c2_46, %c0_47, %c0_48] : memref<1x10x10x4xf32, #tpu.memory_space<vmem>>, vector<1x8x8x4xf32>
    %77 = vector.shape_cast %76 : vector<1x8x8x4xf32> to vector<64x4xf32>
    %78 = arith.truncf %77 : vector<64x4xf32> to vector<64x4xbf16>
    %79 = vector.extract_strided_slice %32 {offsets = [6, 0, 0], sizes = [1, 4, 8], strides = [1, 1, 1]} : vector<9x4x8xbf16> to vector<1x4x8xbf16>
    %80 = vector.shape_cast %79 : vector<1x4x8xbf16> to vector<4x8xbf16>
    %cst_49 = arith.constant dense<0.000000e+00> : vector<64x8xf32>
    %81 = tpu.matmul %78, %80, %cst_49 {dimension_numbers = #tpu.dot_dimension_numbers<[1], [0], [0], [1], [0, 0, 1, 1], [], []>} : vector<64x4xbf16>, vector<4x8xbf16>, vector<64x8xf32> -> vector<64x8xf32>
    %82 = arith.addf %75, %81 : vector<64x8xf32>
    %c0_50 = arith.constant 0 : index
    %c2_51 = arith.constant 2 : index
    %c1_52 = arith.constant 1 : index
    %c0_53 = arith.constant 0 : index
    %83 = vector.load %arg5[%c0_50, %c2_51, %c1_52, %c0_53] : memref<1x10x10x4xf32, #tpu.memory_space<vmem>>, vector<1x8x8x4xf32>
    %84 = vector.shape_cast %83 : vector<1x8x8x4xf32> to vector<64x4xf32>
    %85 = arith.truncf %84 : vector<64x4xf32> to vector<64x4xbf16>
    %86 = vector.extract_strided_slice %32 {offsets = [7, 0, 0], sizes = [1, 4, 8], strides = [1, 1, 1]} : vector<9x4x8xbf16> to vector<1x4x8xbf16>
    %87 = vector.shape_cast %86 : vector<1x4x8xbf16> to vector<4x8xbf16>
    %cst_54 = arith.constant dense<0.000000e+00> : vector<64x8xf32>
    %88 = tpu.matmul %85, %87, %cst_54 {dimension_numbers = #tpu.dot_dimension_numbers<[1], [0], [0], [1], [0, 0, 1, 1], [], []>} : vector<64x4xbf16>, vector<4x8xbf16>, vector<64x8xf32> -> vector<64x8xf32>
    %89 = arith.addf %82, %88 : vector<64x8xf32>
    %c0_55 = arith.constant 0 : index
    %c2_56 = arith.constant 2 : index
    %c2_57 = arith.constant 2 : index
    %c0_58 = arith.constant 0 : index
    %90 = vector.load %arg5[%c0_55, %c2_56, %c2_57, %c0_58] : memref<1x10x10x4xf32, #tpu.memory_space<vmem>>, vector<1x8x8x4xf32>
    %91 = vector.shape_cast %90 : vector<1x8x8x4xf32> to vector<64x4xf32>
    %92 = arith.truncf %91 : vector<64x4xf32> to vector<64x4xbf16>
    %93 = vector.extract_strided_slice %32 {offsets = [8, 0, 0], sizes = [1, 4, 8], strides = [1, 1, 1]} : vector<9x4x8xbf16> to vector<1x4x8xbf16>
    %94 = vector.shape_cast %93 : vector<1x4x8xbf16> to vector<4x8xbf16>
    %cst_59 = arith.constant dense<0.000000e+00> : vector<64x8xf32>
    %95 = tpu.matmul %92, %94, %cst_59 {dimension_numbers = #tpu.dot_dimension_numbers<[1], [0], [0], [1], [0, 0, 1, 1], [], []>} : vector<64x4xbf16>, vector<4x8xbf16>, vector<64x8xf32> -> vector<64x8xf32>
    %96 = arith.addf %89, %95 : vector<64x8xf32>
    %c0_60 = arith.constant 0 : index
    %c0_61 = arith.constant 0 : index
    %97 = vector.load %arg3[%c0_60, %c0_61] : memref<1x8xf32, #tpu.memory_space<vmem>>, vector<1x8xf32>
    %98 = vector.broadcast %97 : vector<1x8xf32> to vector<64x8xf32>
    %99 = arith.addf %96, %98 : vector<64x8xf32>
    %100 = vector.shape_cast %99 : vector<64x8xf32> to vector<1x64x8xf32>
    %cst_62 = arith.constant 0.000000e+00 : f32
    %101 = vector.broadcast %cst_62 : f32 to vector<1x64x8xf32>
    %102 = arith.mulf %101, %100 : vector<1x64x8xf32>
    %cst_63 = arith.constant 0.500250101 : f32
    %103 = vector.broadcast %cst_63 : f32 to vector<1x64x8xf32>
    %104 = arith.mulf %102, %103 : vector<1x64x8xf32>
    %105 = math.floor %104 : vector<1x64x8xf32>
    %cst_64 = arith.constant 1.999000e+00 : f32
    %106 = vector.broadcast %cst_64 : f32 to vector<1x64x8xf32>
    %107 = arith.mulf %106, %105 : vector<1x64x8xf32>
    %108 = arith.subf %102, %107 : vector<1x64x8xf32>
    %109 = arith.addf %108, %100 : vector<1x64x8xf32>
    %cst_65 = arith.constant 1.000000e+00 : f32
    %110 = vector.broadcast %cst_65 : f32 to vector<1x64x8xf32>
    %111 = arith.mulf %110, %100 : vector<1x64x8xf32>
    %cst_66 = arith.constant 0.500250101 : f32
    %112 = vector.broadcast %cst_66 : f32 to vector<1x64x8xf32>
    %113 = arith.mulf %111, %112 : vector<1x64x8xf32>
    %114 = math.floor %113 : vector<1x64x8xf32>
    %cst_67 = arith.constant 1.999000e+00 : f32
    %115 = vector.broadcast %cst_67 : f32 to vector<1x64x8xf32>
    %116 = arith.mulf %115, %114 : vector<1x64x8xf32>
    %117 = arith.subf %111, %116 : vector<1x64x8xf32>
    %118 = arith.addf %117, %100 : vector<1x64x8xf32>
    %cst_68 = arith.constant 2.000000e+00 : f32
    %119 = vector.broadcast %cst_68 : f32 to vector<1x64x8xf32>
    %120 = arith.mulf %119, %100 : vector<1x64x8xf32>
    %cst_69 = arith.constant 0.500250101 : f32
    %121 = vector.broadcast %cst_69 : f32 to vector<1x64x8xf32>
    %122 = arith.mulf %120, %121 : vector<1x64x8xf32>
    %123 = math.floor %122 : vector<1x64x8xf32>
    %cst_70 = arith.constant 1.999000e+00 : f32
    %124 = vector.broadcast %cst_70 : f32 to vector<1x64x8xf32>
    %125 = arith.mulf %124, %123 : vector<1x64x8xf32>
    %126 = arith.subf %120, %125 : vector<1x64x8xf32>
    %127 = arith.addf %126, %100 : vector<1x64x8xf32>
    %cst_71 = arith.constant 3.000000e+00 : f32
    %128 = vector.broadcast %cst_71 : f32 to vector<1x64x8xf32>
    %129 = arith.mulf %128, %100 : vector<1x64x8xf32>
    %cst_72 = arith.constant 0.500250101 : f32
    %130 = vector.broadcast %cst_72 : f32 to vector<1x64x8xf32>
    %131 = arith.mulf %129, %130 : vector<1x64x8xf32>
    %132 = math.floor %131 : vector<1x64x8xf32>
    %cst_73 = arith.constant 1.999000e+00 : f32
    %133 = vector.broadcast %cst_73 : f32 to vector<1x64x8xf32>
    %134 = arith.mulf %133, %132 : vector<1x64x8xf32>
    %135 = arith.subf %129, %134 : vector<1x64x8xf32>
    %136 = arith.addf %135, %100 : vector<1x64x8xf32>
    %cst_74 = arith.constant 4.000000e+00 : f32
    %137 = vector.broadcast %cst_74 : f32 to vector<1x64x8xf32>
    %138 = arith.mulf %137, %100 : vector<1x64x8xf32>
    %cst_75 = arith.constant 0.500250101 : f32
    %139 = vector.broadcast %cst_75 : f32 to vector<1x64x8xf32>
    %140 = arith.mulf %138, %139 : vector<1x64x8xf32>
    %141 = math.floor %140 : vector<1x64x8xf32>
    %cst_76 = arith.constant 1.999000e+00 : f32
    %142 = vector.broadcast %cst_76 : f32 to vector<1x64x8xf32>
    %143 = arith.mulf %142, %141 : vector<1x64x8xf32>
    %144 = arith.subf %138, %143 : vector<1x64x8xf32>
    %145 = arith.addf %144, %100 : vector<1x64x8xf32>
    %cst_77 = arith.constant 5.000000e+00 : f32
    %146 = vector.broadcast %cst_77 : f32 to vector<1x64x8xf32>
    %147 = arith.mulf %146, %100 : vector<1x64x8xf32>
    %cst_78 = arith.constant 0.500250101 : f32
    %148 = vector.broadcast %cst_78 : f32 to vector<1x64x8xf32>
    %149 = arith.mulf %147, %148 : vector<1x64x8xf32>
    %150 = math.floor %149 : vector<1x64x8xf32>
    %cst_79 = arith.constant 1.999000e+00 : f32
    %151 = vector.broadcast %cst_79 : f32 to vector<1x64x8xf32>
    %152 = arith.mulf %151, %150 : vector<1x64x8xf32>
    %153 = arith.subf %147, %152 : vector<1x64x8xf32>
    %154 = arith.addf %153, %100 : vector<1x64x8xf32>
    %cst_80 = arith.constant 6.000000e+00 : f32
    %155 = vector.broadcast %cst_80 : f32 to vector<1x64x8xf32>
    %156 = arith.mulf %155, %100 : vector<1x64x8xf32>
    %cst_81 = arith.constant 0.500250101 : f32
    %157 = vector.broadcast %cst_81 : f32 to vector<1x64x8xf32>
    %158 = arith.mulf %156, %157 : vector<1x64x8xf32>
    %159 = math.floor %158 : vector<1x64x8xf32>
    %cst_82 = arith.constant 1.999000e+00 : f32
    %160 = vector.broadcast %cst_82 : f32 to vector<1x64x8xf32>
    %161 = arith.mulf %160, %159 : vector<1x64x8xf32>
    %162 = arith.subf %156, %161 : vector<1x64x8xf32>
    %163 = arith.addf %162, %100 : vector<1x64x8xf32>
    %cst_83 = arith.constant 7.000000e+00 : f32
    %164 = vector.broadcast %cst_83 : f32 to vector<1x64x8xf32>
    %165 = arith.mulf %164, %100 : vector<1x64x8xf32>
    %cst_84 = arith.constant 0.500250101 : f32
    %166 = vector.broadcast %cst_84 : f32 to vector<1x64x8xf32>
    %167 = arith.mulf %165, %166 : vector<1x64x8xf32>
    %168 = math.floor %167 : vector<1x64x8xf32>
    %cst_85 = arith.constant 1.999000e+00 : f32
    %169 = vector.broadcast %cst_85 : f32 to vector<1x64x8xf32>
    %170 = arith.mulf %169, %168 : vector<1x64x8xf32>
    %171 = arith.subf %165, %170 : vector<1x64x8xf32>
    %172 = arith.addf %171, %100 : vector<1x64x8xf32>
    %173 = vector.shape_cast %109 : vector<1x64x8xf32> to vector<1x1x64x8xf32>
    %174 = vector.shape_cast %118 : vector<1x64x8xf32> to vector<1x1x64x8xf32>
    %175 = vector.shape_cast %127 : vector<1x64x8xf32> to vector<1x1x64x8xf32>
    %176 = vector.shape_cast %136 : vector<1x64x8xf32> to vector<1x1x64x8xf32>
    %177 = vector.shape_cast %145 : vector<1x64x8xf32> to vector<1x1x64x8xf32>
    %178 = vector.shape_cast %154 : vector<1x64x8xf32> to vector<1x1x64x8xf32>
    %179 = vector.shape_cast %163 : vector<1x64x8xf32> to vector<1x1x64x8xf32>
    %180 = vector.shape_cast %172 : vector<1x64x8xf32> to vector<1x1x64x8xf32>
    %181 = tpu.concatenate %173, %174, %175, %176, %177, %178, %179, %180 in 0 : vector<1x1x64x8xf32>, vector<1x1x64x8xf32>, vector<1x1x64x8xf32>, vector<1x1x64x8xf32>, vector<1x1x64x8xf32>, vector<1x1x64x8xf32>, vector<1x1x64x8xf32>, vector<1x1x64x8xf32> -> vector<8x1x64x8xf32>
    %cst_86 = arith.constant 0.000000e+00 : f32
    %182 = vector.broadcast %cst_86 : f32 to vector<8x64x8xf32>
    %183 = vector.shape_cast %181 : vector<8x1x64x8xf32> to vector<8x64x8xf32>
    %cst_87 = arith.constant 1.999000e+00 : f32
    %184 = vector.broadcast %cst_87 : f32 to vector<8x64x8xf32>
    %185 = arith.mulf %184, %182 : vector<8x64x8xf32>
    %186 = arith.subf %183, %185 : vector<8x64x8xf32>
    %cst_88 = arith.constant 1.999000e+00 : f32
    %187 = vector.broadcast %cst_88 : f32 to vector<8x64x8xf32>
    %188 = arith.cmpf oge, %186, %187 : vector<8x64x8xf32>
    %189 = arith.extui %188 : vector<8x64x8xi1> to vector<8x64x8xi32>
    %190 = arith.sitofp %189 : vector<8x64x8xi32> to vector<8x64x8xf32>
    %191 = arith.truncf %190 : vector<8x64x8xf32> to vector<8x64x8xbf16>
    %c0_89 = arith.constant 0 : index
    %c0_90 = arith.constant 0 : index
    %c0_91 = arith.constant 0 : index
    %c0_92 = arith.constant 0 : index
    %192 = vector.load %arg4[%c0_89, %c0_90, %c0_91, %c0_92] : memref<1x8x64x8xbf16, #tpu.memory_space<vmem>>, vector<1x8x64x8xbf16>
    %193 = vector.shape_cast %192 : vector<1x8x64x8xbf16> to vector<8x64x8xbf16>
    %194 = vector.shape_cast %191 : vector<8x64x8xbf16> to vector<1x8x64x8xbf16>
    tpu.vector_store %arg4[%c0_89, %c0_90, %c0_91, %c0_92], %194 {strides = array<i32>} : memref<1x8x64x8xbf16, #tpu.memory_space<vmem>>, vector<1x8x64x8xbf16>,
    return
  }
  func.func @transform_0(%arg0: i32) -> (i32, i32, i32, i32, i32) {
    %c0_i32 = arith.constant 0 : i32
    %c0_i32_0 = arith.constant 0 : i32
    %c0_i32_1 = arith.constant 0 : i32
    %c0_i32_2 = arith.constant 0 : i32
    %c0_i32_3 = arith.constant 0 : i32
    return %arg0, %c0_i32, %c0_i32_0, %c0_i32_1, %c0_i32_2 : i32, i32, i32, i32, i32
  }
  func.func @transform_1(%arg0: i32) -> (i32, i32, i32) {
    %c0_i32 = arith.constant 0 : i32
    %c0_i32_0 = arith.constant 0 : i32
    %c0_i32_1 = arith.constant 0 : i32
    %c0_i32_2 = arith.constant 0 : i32
    return %c0_i32, %c0_i32_0, %c0_i32_1 : i32, i32, i32
  }
  func.func @transform_2(%arg0: i32) -> (i32, i32) {
    %c0_i32 = arith.constant 0 : i32
    %c0_i32_0 = arith.constant 0 : i32
    %c0_i32_1 = arith.constant 0 : i32
    return %c0_i32, %c0_i32_0 : i32, i32
  }
  func.func @transform_3(%arg0: i32) -> (i32, i32, i32, i32) {
    %c0_i32 = arith.constant 0 : i32
    %c0_i32_0 = arith.constant 0 : i32
    %c0_i32_1 = arith.constant 0 : i32
    %c0_i32_2 = arith.constant 0 : i32
    return %arg0, %c0_i32, %c0_i32_0, %c0_i32_1 : i32, i32, i32, i32
  }
}

</mosaic_0001>

<llo_original>
// kernel: repvggplus_block_forward.1
$region0: #{repvggplus_block_forward.1}
  #allocation0 [shape = 'u32[]', space=smem, size = 0x4, offset = 0x4, fixed_abs, tag = 'smem constant byte address 0x4 - core index']
  #allocation1 [shape = 'u32[144,128]{1,0:T(1,128)}', space=vmem, size = 0x12000, scoped, tag = 'internal scratch']
  #allocation2 [shape = 'f32[1,10,10,4]{3,2,1,0:T(8,128)}', space=vmem, size = 0x14000, scoped, tag = 'scratch operand']
  %s0 = inlined_call_operand.vmem [shape: bf16[2,8,8,8,4], index: 0, kind: input, shape index: {}]
  %s1 = inlined_call_operand.vmem [shape: bf16[9,4,8], index: 1, kind: input, shape index: {}]
  %s2 = inlined_call_operand.vmem [shape: f32[1,8], index: 2, kind: input, shape index: {}]
  %s3 = inlined_call_operand.vmem [shape: bf16[2,8,64,8], index: 3, kind: output, shape index: {}]
  %s4 = sld [smem:[#allocation0]]
  $region45: #{repvggplus_block_forward.1} parent=0
    _
  %s6 = ssub.s32 1, %s4
  %s7 = scalar_select 0, %s6, %s4
  loop: start=0, step=1, limit=4
  $region2: #{repvggplus_block_forward.1} parent=0 // loop_pre_header
    _
  $region3: #{repvggplus_block_forward.1} parent=0 // loop_header
    %s9 = sphi 0, %s13
    %p10 = scmp.ge.s32.totalorder %s9, 4
    %s19 = sphi 0, %s21
    %s22 = sphi 0, %s19
    %s23 = sphi 0, %s22
    %s39 = sphi 0, %s23
    %s43 = sphi 0, %s43
    %s45 = sphi 0, %s43
    %s46 = sphi 0, %s45
    %s60 = sphi 0, %s46
    %s64 = sphi 0, %s64
    %s66 = sphi 0, %s64
    %s67 = sphi 0, %s66
    %s81 = sphi 0, %s67
    %s87 = sphi 0, %s89
    %s90 = sphi 0, %s87
    %s91 = sphi 0, %s90
    %s107 = sphi 0, %s91
  $region4: #{repvggplus_block_forward.1} parent=0 // loop_header_branch
    %12 = sbr.rel (%p10) target = $region8
  $region5: #{repvggplus_block_forward.1} parent=0 // loop_body
    %s14 = ssub.s32 %s9, 1
    %s15 = ssub.s32 %s9, 2
    %s16 = sadd.s32 %s9, 1
    %s17 = ssub.s32 %s9, %s16
    %p18 = scmp.eq.s32.totalorder %s17, 0
    %s20 = sadd.s32 %s19, 1
    %s21 = scalar_select %p18, %s19, %s20
    %p24 = pneg %p18
    %p25 = scmp.eq.s32.totalorder %s9, 1
    %p26 = por %p24, %p25
    %p27 = scmp.ne.s32.totalorder %s19, %s22
    %p28 = scmp.eq.s32.totalorder %s9, 0
    %p29 = por %p27, %p28
    %p30 = scmp.ne.s32.totalorder %s19, %s22
    %p31 = scmp.eq.s32.totalorder %s14, 1
    %p32 = por %p30, %p31
    %p33 = scmp.ne.s32.totalorder %s22, %s23
    %p34 = scmp.eq.s32.totalorder %s14, 0
    %p35 = por %p33, %p34
    %p36 = scmp.ne.s32.totalorder %s22, %s23
    %p37 = scmp.eq.s32.totalorder %s15, 1
    %p38 = por %p36, %p37
    %p40 = scmp.ne.s32.totalorder %s23, %s39
    %p41 = scmp.eq.s32.totalorder %s15, 0
    %p42 = por %p40, %p41
    %s44 = sadd.s32 %s43, 1
    %p47 = scmp.eq.s32.totalorder %s9, 1
    %p48 = scmp.ne.s32.totalorder %s43, %s45
    %p49 = scmp.eq.s32.totalorder %s9, 0
    %p50 = por %p48, %p49
    %p51 = scmp.ne.s32.totalorder %s43, %s45
    %p52 = scmp.eq.s32.totalorder %s14, 1
    %p53 = por %p51, %p52
    %p54 = scmp.ne.s32.totalorder %s45, %s46
    %p55 = scmp.eq.s32.totalorder %s14, 0
    %p56 = por %p54, %p55
    %p57 = scmp.ne.s32.totalorder %s45, %s46
    %p58 = scmp.eq.s32.totalorder %s15, 1
    %p59 = por %p57, %p58
    %p61 = scmp.ne.s32.totalorder %s46, %s60
    %p62 = scmp.eq.s32.totalorder %s15, 0
    %p63 = por %p61, %p62
    %s65 = sadd.s32 %s64, 1
    %p68 = scmp.eq.s32.totalorder %s9, 1
    %p69 = scmp.ne.s32.totalorder %s64, %s66
    %p70 = scmp.eq.s32.totalorder %s9, 0
    %p71 = por %p69, %p70
    %p72 = scmp.ne.s32.totalorder %s64, %s66
    %p73 = scmp.eq.s32.totalorder %s14, 1
    %p74 = por %p72, %p73
    %p75 = scmp.ne.s32.totalorder %s66, %s67
    %p76 = scmp.eq.s32.totalorder %s14, 0
    %p77 = por %p75, %p76
    %p78 = scmp.ne.s32.totalorder %s66, %s67
    %p79 = scmp.eq.s32.totalorder %s15, 1
    %p80 = por %p78, %p79
    %p82 = scmp.ne.s32.totalorder %s67, %s81
    %p83 = scmp.eq.s32.totalorder %s15, 0
    %p84 = por %p82, %p83
    %s85 = ssub.s32 %s9, %s16
    %p86 = scmp.eq.s32.totalorder %s85, 0
    %s88 = sadd.s32 %s87, 1
    %s89 = scalar_select %p86, %s87, %s88
    %p92 = pneg %p86
    %p93 = scmp.eq.s32.totalorder %s9, 1
    %p94 = por %p92, %p93
    %p95 = scmp.ne.s32.totalorder %s87, %s90
    %p96 = scmp.eq.s32.totalorder %s9, 0
    %p97 = por %p95, %p96
    %p98 = scmp.ne.s32.totalorder %s87, %s90
    %p99 = scmp.eq.s32.totalorder %s14, 1
    %p100 = por %p98, %p99
    %p101 = scmp.ne.s32.totalorder %s90, %s91
    %p102 = scmp.eq.s32.totalorder %s14, 0
    %p103 = por %p101, %p102
    %p104 = scmp.ne.s32.totalorder %s90, %s91
    %p105 = scmp.eq.s32.totalorder %s15, 1
    %p106 = por %p104, %p105
    %p108 = scmp.ne.s32.totalorder %s91, %s107
    %p109 = scmp.eq.s32.totalorder %s15, 0
    %p110 = por %p108, %p109
    %p111 = scmp.le.s32.totalorder 1, %s9
    %p112 = scmp.lt.s32.totalorder %s9, 3
    %p113 = pnand %p111, %p112
    %p114 = pneg %p113
    // Predicated region
    $region9: #{repvggplus_block_forward.1} parent=5 // pred_check
      _
    $region10: #{repvggplus_block_forward.1} parent=5 // pred_check_branch
      %116 = sbr.rel (%p113) target = $region12
    $region11: #{repvggplus_block_forward.1} parent=5 // pred_region
      %s117 = ssub.s32 %s9, 1
      // Predicated region
      $region13: #{repvggplus_block_forward.1} parent=11 // pred_check
        %p118 = pneg %p56
      $region14: #{repvggplus_block_forward.1} parent=11 // pred_check_branch
        %120 = sbr.rel (%p118) target = $region16
      $region15: #{repvggplus_block_forward.1} parent=11 // pred_region
        _
      $region16: #{repvggplus_block_forward.1} parent=11 // pred_fallthru
        _
      // Predicated region
      $region17: #{repvggplus_block_forward.1} parent=11 // pred_check
        %p121 = pneg %p77
      $region18: #{repvggplus_block_forward.1} parent=11 // pred_check_branch
        %123 = sbr.rel (%p121) target = $region20
      $region19: #{repvggplus_block_forward.1} parent=11 // pred_region
        _
      $region20: #{repvggplus_block_forward.1} parent=11 // pred_fallthru
        _
    $region12: #{repvggplus_block_forward.1} parent=5 // pred_fallthru
      _
    %p124 = scmp.lt.s32.totalorder %s9, 2
    // Predicated region
    $region21: #{repvggplus_block_forward.1} parent=5 // pred_check
      %p125 = pneg %p124
    $region22: #{repvggplus_block_forward.1} parent=5 // pred_check_branch
      %127 = sbr.rel (%p125) target = $region24
    $region23: #{repvggplus_block_forward.1} parent=5 // pred_region
      // Predicated region
      $region25: #{repvggplus_block_forward.1} parent=23 // pred_check
        %p128 = pneg %p29
      $region26: #{repvggplus_block_forward.1} parent=23 // pred_check_branch
        %130 = sbr.rel (%p128) target = $region28
      $region27: #{repvggplus_block_forward.1} parent=23 // pred_region
        %p131 = scmp.lt.s32.totalorder %s9, 1
        %s132 = scalar_select %p131, %s9, 1
        %s133 = smul.addr %s132, 64
        %s134 = smul.addr %s133, 4
        %s135 = scalar_lea.vmem %s0, %s134
      $region28: #{repvggplus_block_forward.1} parent=23 // pred_fallthru
        _
    $region24: #{repvggplus_block_forward.1} parent=5 // pred_fallthru
      _
    %p136 = scmp.le.s32.totalorder 1, %s9
    %p137 = scmp.lt.s32.totalorder %s9, 3
    %p138 = pnand %p136, %p137
    %p139 = pneg %p138
    // Predicated region
    $region29: #{repvggplus_block_forward.1} parent=5 // pred_check
      _
    $region30: #{repvggplus_block_forward.1} parent=5 // pred_check_branch
      %141 = sbr.rel (%p138) target = $region32
    $region31: #{repvggplus_block_forward.1} parent=5 // pred_region
      %s142 = ssub.s32 %s9, 1
      %p143 = scmp.lt.s32.totalorder %s14, 1
      %s144 = scalar_select %p143, %s14, 1
      %s145 = smul.addr %s144, 64
      %s146 = smul.addr %s145, 4
      %s147 = scalar_lea.vmem %s0, %s146
      %p148 = pneg %p35
      %p149 = pneg %p32
      %p150 = pneg %p56
      %p151 = pneg %p53
      %p152 = pneg %p77
      %p153 = pneg %p74
      %p154 = pneg %p103
      %p155 = pneg %p100
      %p156 = scmp.lt.s32.totalorder %s14, 1
      %s157 = scalar_select %p156, %s14, 1
      %s158 = smul.addr %s157, 64
      %s159 = smul.addr %s158, 4
      %s160 = scalar_lea.vmem %s3, %s159
      %p161 = scmp.lt.s32.totalorder %s14, 1
      %s162 = scalar_select %p161, %s14, 1
      %s163 = smul.addr %s162, 64
      %s164 = smul.addr %s163, 4
      %s165 = scalar_lea.vmem %s0, %s164
      %p166 = scmp.lt.s32.totalorder %s14, 1
      %s167 = scalar_select %p166, %s14, 1
      %s168 = smul.addr %s167, 64
      %s169 = smul.addr %s168, 4
      %s170 = scalar_lea.vmem %s3, %s169
      %v172 = vld [vmem:[%s165] sm:$0xf]
      %v173 = vld [vmem:[%s165 + $0x4] sm:$0xf]
      %v174 = vld [vmem:[%s165 + $0x8] sm:$0xf]
      %v175 = vld [vmem:[%s165 + $0xc] sm:$0xf]
      %v176 = vld [vmem:[%s165 + $0x10] sm:$0xf]
      %v177 = vld [vmem:[%s165 + $0x14] sm:$0xf]
      %v178 = vld [vmem:[%s165 + $0x18] sm:$0xf]
      %v179 = vld [vmem:[%s165 + $0x1c] sm:$0xf]
      %v180 = vld [vmem:[%s165 + $0x20] sm:$0xf]
      %v181 = vld [vmem:[%s165 + $0x24] sm:$0xf]
      %v182 = vld [vmem:[%s165 + $0x28] sm:$0xf]
      %v183 = vld [vmem:[%s165 + $0x2c] sm:$0xf]
      %v184 = vld [vmem:[%s165 + $0x30] sm:$0xf]
      %v185 = vld [vmem:[%s165 + $0x34] sm:$0xf]
      %v186 = vld [vmem:[%s165 + $0x38] sm:$0xf]
      %v187 = vld [vmem:[%s165 + $0x3c] sm:$0xf]
      %v188 = vld [vmem:[%s165 + $0x40] sm:$0xf]
      %v189 = vld [vmem:[%s165 + $0x44] sm:$0xf]
      %v190 = vld [vmem:[%s165 + $0x48] sm:$0xf]
      %v191 = vld [vmem:[%s165 + $0x4c] sm:$0xf]
      %v192 = vld [vmem:[%s165 + $0x50] sm:$0xf]
      %v193 = vld [vmem:[%s165 + $0x54] sm:$0xf]
      %v194 = vld [vmem:[%s165 + $0x58] sm:$0xf]
      %v195 = vld [vmem:[%s165 + $0x5c] sm:$0xf]
      %v196 = vld [vmem:[%s165 + $0x60] sm:$0xf]
      %v197 = vld [vmem:[%s165 + $0x64] sm:$0xf]
      %v198 = vld [vmem:[%s165 + $0x68] sm:$0xf]
      %v199 = vld [vmem:[%s165 + $0x6c] sm:$0xf]
      %v200 = vld [vmem:[%s165 + $0x70] sm:$0xf]
      %v201 = vld [vmem:[%s165 + $0x74] sm:$0xf]
      %v202 = vld [vmem:[%s165 + $0x78] sm:$0xf]
      %v203 = vld [vmem:[%s165 + $0x7c] sm:$0xf]
      %v204 = vld [vmem:[%s165 + $0x80] sm:$0xf]
      %v205 = vld [vmem:[%s165 + $0x84] sm:$0xf]
      %v206 = vld [vmem:[%s165 + $0x88] sm:$0xf]
      %v207 = vld [vmem:[%s165 + $0x8c] sm:$0xf]
      %v208 = vld [vmem:[%s165 + $0x90] sm:$0xf]
      %v209 = vld [vmem:[%s165 + $0x94] sm:$0xf]
      %v210 = vld [vmem:[%s165 + $0x98] sm:$0xf]
      %v211 = vld [vmem:[%s165 + $0x9c] sm:$0xf]
      %v212 = vld [vmem:[%s165 + $0xa0] sm:$0xf]
      %v213 = vld [vmem:[%s165 + $0xa4] sm:$0xf]
      %v214 = vld [vmem:[%s165 + $0xa8] sm:$0xf]
      %v215 = vld [vmem:[%s165 + $0xac] sm:$0xf]
      %v216 = vld [vmem:[%s165 + $0xb0] sm:$0xf]
      %v217 = vld [vmem:[%s165 + $0xb4] sm:$0xf]
      %v218 = vld [vmem:[%s165 + $0xb8] sm:$0xf]
      %v219 = vld [vmem:[%s165 + $0xbc] sm:$0xf]
      %v220 = vld [vmem:[%s165 + $0xc0] sm:$0xf]
      %v221 = vld [vmem:[%s165 + $0xc4] sm:$0xf]
      %v222 = vld [vmem:[%s165 + $0xc8] sm:$0xf]
      %v223 = vld [vmem:[%s165 + $0xcc] sm:$0xf]
      %v224 = vld [vmem:[%s165 + $0xd0] sm:$0xf]
      %v225 = vld [vmem:[%s165 + $0xd4] sm:$0xf]
      %v226 = vld [vmem:[%s165 + $0xd8] sm:$0xf]
      %v227 = vld [vmem:[%s165 + $0xdc] sm:$0xf]
      %v228 = vld [vmem:[%s165 + $0xe0] sm:$0xf]
      %v229 = vld [vmem:[%s165 + $0xe4] sm:$0xf]
      %v230 = vld [vmem:[%s165 + $0xe8] sm:$0xf]
      %v231 = vld [vmem:[%s165 + $0xec] sm:$0xf]
      %v232 = vld [vmem:[%s165 + $0xf0] sm:$0xf]
      %v233 = vld [vmem:[%s165 + $0xf4] sm:$0xf]
      %v234 = vld [vmem:[%s165 + $0xf8] sm:$0xf]
      %v235 = vld [vmem:[%s165 + $0xfc] sm:$0xf]
      %v236 = vunpack.c.l.bf16 %v172
      %v237 = vunpack.c.l.bf16 %v173
      %v238 = vunpack.c.l.bf16 %v174
      %v239 = vunpack.c.l.bf16 %v175
      %v240 = vunpack.c.l.bf16 %v176
      %v241 = vunpack.c.l.bf16 %v177
      %v242 = vunpack.c.l.bf16 %v178
      %v243 = vunpack.c.l.bf16 %v179
      %v244 = vunpack.c.l.bf16 %v180
      %v245 = vunpack.c.l.bf16 %v181
      %v246 = vunpack.c.l.bf16 %v182
      %v247 = vunpack.c.l.bf16 %v183
      %v248 = vunpack.c.l.bf16 %v184
      %v249 = vunpack.c.l.bf16 %v185
      %v250 = vunpack.c.l.bf16 %v186
      %v251 = vunpack.c.l.bf16 %v187
      %v252 = vunpack.c.l.bf16 %v188
      %v253 = vunpack.c.l.bf16 %v189
      %v254 = vunpack.c.l.bf16 %v190
      %v255 = vunpack.c.l.bf16 %v191
      %v256 = vunpack.c.l.bf16 %v192
      %v257 = vunpack.c.l.bf16 %v193
      %v258 = vunpack.c.l.bf16 %v194
      %v259 = vunpack.c.l.bf16 %v195
      %v260 = vunpack.c.l.bf16 %v196
      %v261 = vunpack.c.l.bf16 %v197
      %v262 = vunpack.c.l.bf16 %v198
      %v263 = vunpack.c.l.bf16 %v199
      %v264 = vunpack.c.l.bf16 %v200
      %v265 = vunpack.c.l.bf16 %v201
      %v266 = vunpack.c.l.bf16 %v202
      %v267 = vunpack.c.l.bf16 %v203
      %v268 = vunpack.c.l.bf16 %v204
      %v269 = vunpack.c.l.bf16 %v205
      %v270 = vunpack.c.l.bf16 %v206
      %v271 = vunpack.c.l.bf16 %v207
      %v272 = vunpack.c.l.bf16 %v208
      %v273 = vunpack.c.l.bf16 %v209
      %v274 = vunpack.c.l.bf16 %v210
      %v275 = vunpack.c.l.bf16 %v211
      %v276 = vunpack.c.l.bf16 %v212
      %v277 = vunpack.c.l.bf16 %v213
      %v278 = vunpack.c.l.bf16 %v214
      %v279 = vunpack.c.l.bf16 %v215
      %v280 = vunpack.c.l.bf16 %v216
      %v281 = vunpack.c.l.bf16 %v217
      %v282 = vunpack.c.l.bf16 %v218
      %v283 = vunpack.c.l.bf16 %v219
      %v284 = vunpack.c.l.bf16 %v220
      %v285 = vunpack.c.l.bf16 %v221
      %v286 = vunpack.c.l.bf16 %v222
      %v287 = vunpack.c.l.bf16 %v223
      %v288 = vunpack.c.l.bf16 %v224
      %v289 = vunpack.c.l.bf16 %v225
      %v290 = vunpack.c.l.bf16 %v226
      %v291 = vunpack.c.l.bf16 %v227
      %v292 = vunpack.c.l.bf16 %v228
      %v293 = vunpack.c.l.bf16 %v229
      %v294 = vunpack.c.l.bf16 %v230
      %v295 = vunpack.c.l.bf16 %v231
      %v296 = vunpack.c.l.bf16 %v232
      %v297 = vunpack.c.l.bf16 %v233
      %v298 = vunpack.c.l.bf16 %v234
      %v299 = vunpack.c.l.bf16 %v235
      %v300 = vadd.f32 %v236, %v244
      %v301 = vadd.f32 %v237, %v245
      %v302 = vadd.f32 %v238, %v246
      %v303 = vadd.f32 %v239, %v247
      %v304 = vadd.f32 %v240, %v248
      %v305 = vadd.f32 %v241, %v249
      %v306 = vadd.f32 %v242, %v250
      %v307 = vadd.f32 %v243, %v251
      %v308 = vadd.f32 %v300, %v252
      %v309 = vadd.f32 %v301, %v253
      %v310 = vadd.f32 %v302, %v254
      %v311 = vadd.f32 %v303, %v255
      %v312 = vadd.f32 %v304, %v256
      %v313 = vadd.f32 %v305, %v257
      %v314 = vadd.f32 %v306, %v258
      %v315 = vadd.f32 %v307, %v259
      %v316 = vadd.f32 %v308, %v260
      %v317 = vadd.f32 %v309, %v261
      %v318 = vadd.f32 %v310, %v262
      %v319 = vadd.f32 %v311, %v263
      %v320 = vadd.f32 %v312, %v264
      %v321 = vadd.f32 %v313, %v265
      %v322 = vadd.f32 %v314, %v266
      %v323 = vadd.f32 %v315, %v267
      %v324 = vadd.f32 %v316, %v268
      %v325 = vadd.f32 %v317, %v269
      %v326 = vadd.f32 %v318, %v270
      %v327 = vadd.f32 %v319, %v271
      %v328 = vadd.f32 %v320, %v272
      %v329 = vadd.f32 %v321, %v273
      %v330 = vadd.f32 %v322, %v274
      %v331 = vadd.f32 %v323, %v275
      %v332 = vadd.f32 %v324, %v276
      %v333 = vadd.f32 %v325, %v277
      %v334 = vadd.f32 %v326, %v278
      %v335 = vadd.f32 %v327, %v279
      %v336 = vadd.f32 %v328, %v280
      %v337 = vadd.f32 %v329, %v281
      %v338 = vadd.f32 %v330, %v282
      %v339 = vadd.f32 %v331, %v283
      %v340 = vadd.f32 %v332, %v284
      %v341 = vadd.f32 %v333, %v285
      %v342 = vadd.f32 %v334, %v286
      %v343 = vadd.f32 %v335, %v287
      %v344 = vadd.f32 %v336, %v288
      %v345 = vadd.f32 %v337, %v289
      %v346 = vadd.f32 %v338, %v290
      %v347 = vadd.f32 %v339, %v291
      %v348 = vadd.f32 %v340, %v292
      %v349 = vadd.f32 %v341, %v293
      %v350 = vadd.f32 %v342, %v294
      %v351 = vadd.f32 %v343, %v295
      %v352 = vadd.f32 %v344, %v296
      %v353 = vadd.f32 %v345, %v297
      %v354 = vadd.f32 %v346, %v298
      %v355 = vadd.f32 %v347, %v299
      %v356 = vmul.f32 %v348, 0.125
      %v357 = vmul.f32 %v349, 0.125
      %v358 = vmul.f32 %v350, 0.125
      %v359 = vmul.f32 %v351, 0.125
      %v360 = vmul.f32 %v352, 0.125
      %v361 = vmul.f32 %v353, 0.125
      %v362 = vmul.f32 %v354, 0.125
      %v363 = vmul.f32 %v355, 0.125
      %vm364 = vcmask 31744
      %365 = vst.msk [vmem:[#allocation2] sm:$0xff] %vm364, 0.0
      %vm366 = vcmask 25600
      %367 = vst.msk [vmem:[#allocation2 + $0x8] sm:$0x3] %vm366, 0.0
      %368 = vst.msk [vmem:[#allocation2 + $0x10] sm:$0xff] %vm364, 0.0
      %369 = vst.msk [vmem:[#allocation2 + $0x18] sm:$0x3] %vm366, 0.0
      %370 = vst.msk [vmem:[#allocation2 + $0x20] sm:$0xff] %vm364, 0.0
      %371 = vst.msk [vmem:[#allocation2 + $0x28] sm:$0x3] %vm366, 0.0
      %372 = vst.msk [vmem:[#allocation2 + $0x30] sm:$0xff] %vm364, 0.0
      %373 = vst.msk [vmem:[#allocation2 + $0x38] sm:$0x3] %vm366, 0.0
      %374 = vst.msk [vmem:[#allocation2 + $0x40] sm:$0xff] %vm364, 0.0
      %375 = vst.msk [vmem:[#allocation2 + $0x48] sm:$0x3] %vm366, 0.0
      %376 = vst.msk [vmem:[#allocation2 + $0x50] sm:$0xff] %vm364, 0.0
      %377 = vst.msk [vmem:[#allocation2 + $0x58] sm:$0x3] %vm366, 0.0
      %378 = vst.msk [vmem:[#allocation2 + $0x60] sm:$0xff] %vm364, 0.0
      %379 = vst.msk [vmem:[#allocation2 + $0x68] sm:$0x3] %vm366, 0.0
      %380 = vst.msk [vmem:[#allocation2 + $0x70] sm:$0xff] %vm364, 0.0
      %381 = vst.msk [vmem:[#allocation2 + $0x78] sm:$0x3] %vm366, 0.0
      %382 = vst.msk [vmem:[#allocation2 + $0x80] sm:$0xff] %vm364, 0.0
      %383 = vst.msk [vmem:[#allocation2 + $0x88] sm:$0x3] %vm366, 0.0
      %384 = vst.msk [vmem:[#allocation2 + $0x90] sm:$0xff] %vm364, 0.0
      %385 = vst.msk [vmem:[#allocation2 + $0x98] sm:$0x3] %vm366, 0.0
      %s386 = scalar_lea.vmem [#allocation2], 16
      %387 = vst.msk [vmem:[%s386 + $0x1] sm:$0xff] %vm364, %v356
      %388 = vst.msk [vmem:[%s386 + $0x11] sm:$0xff] %vm364, %v357
      %389 = vst.msk [vmem:[%s386 + $0x21] sm:$0xff] %vm364, %v358
      %390 = vst.msk [vmem:[%s386 + $0x31] sm:$0xff] %vm364, %v359
      %391 = vst.msk [vmem:[%s386 + $0x41] sm:$0xff] %vm364, %v360
      %392 = vst.msk [vmem:[%s386 + $0x51] sm:$0xff] %vm364, %v361
      %393 = vst.msk [vmem:[%s386 + $0x61] sm:$0xff] %vm364, %v362
      %394 = vst.msk [vmem:[%s386 + $0x71] sm:$0xff] %vm364, %v363
      %v395 = vld [vmem:[%s1] sm:$0x3]
      %v396 = vld [vmem:[%s1 + $0x2] sm:$0x3]
      %v397 = vld [vmem:[%s1 + $0x4] sm:$0x3]
      %v398 = vld [vmem:[%s1 + $0x6] sm:$0x3]
      %v399 = vld [vmem:[%s1 + $0x8] sm:$0x3]
      %v400 = vld [vmem:[%s1 + $0xa] sm:$0x3]
      %v401 = vld [vmem:[%s1 + $0xc] sm:$0x3]
      %v402 = vld [vmem:[%s1 + $0xe] sm:$0x3]
      %v403 = vld [vmem:[%s1 + $0x10] sm:$0x3]
      %v404 = vld [vmem:[#allocation2] sm:$0xff]
      %v405 = vld [vmem:[#allocation2 + $0x10] sm:$0xff]
      %v406 = vld [vmem:[#allocation2 + $0x20] sm:$0xff]
      %v407 = vld [vmem:[#allocation2 + $0x30] sm:$0xff]
      %v408 = vld [vmem:[#allocation2 + $0x40] sm:$0xff]
      %v409 = vld [vmem:[#allocation2 + $0x50] sm:$0xff]
      %v410 = vld [vmem:[#allocation2 + $0x60] sm:$0xff]
      %v411 = vld [vmem:[#allocation2 + $0x70] sm:$0xff]
      %v412 = vpack.c.bf16 %v405, %v404
      %v413 = vpack.c.bf16 %v407, %v406
      %v414 = vpack.c.bf16 %v409, %v408
      %v415 = vpack.c.bf16 %v411, %v410
      %v416 = vld [vmem:[#allocation2 + $0x1] sm:$0xff]
      %v417 = vld [vmem:[#allocation2 + $0x11] sm:$0xff]
      %v418 = vld [vmem:[#allocation2 + $0x21] sm:$0xff]
      %v419 = vld [vmem:[#allocation2 + $0x31] sm:$0xff]
      %v420 = vld [vmem:[#allocation2 + $0x41] sm:$0xff]
      %v421 = vld [vmem:[#allocation2 + $0x51] sm:$0xff]
      %v422 = vld [vmem:[#allocation2 + $0x61] sm:$0xff]
      %v423 = vld [vmem:[#allocation2 + $0x71] sm:$0xff]
      %v424 = vpack.c.bf16 %v417, %v416
      %v425 = vpack.c.bf16 %v419, %v418
      %v426 = vpack.c.bf16 %v421, %v420
      %v427 = vpack.c.bf16 %v423, %v422
      %v429 = vsel %vm364, %v424, 0
      %v432 = vsel %vm364, %v425, 0
      %v435 = vsel %vm364, %v426, 0
      %v438 = vsel %vm364, %v427, 0
      %vm440 = vcmask 1041408
      %v442 = vsel %vm440, %v396, 0
      %444 = vmatprep.subr.bf16.mxu0 0
      %445 = vmatpush1.bf16.msra.mxu0 %v442
      %446 = vmatprep.subr.bf16.mxu0 0
      %447 = vmatpush1.bf16.msra.mxu0 0
      %448 = vmatprep.subr.bf16.mxu0 0
      %449 = vmatpush1.bf16.msra.mxu0 0
      %450 = vmatprep.subr.bf16.mxu0 0
      %451 = vmatpush1.bf16.msra.mxu0 0
      %452 = vmatprep.subr.bf16.mxu0 0
      %453 = vmatpush1.bf16.msra.mxu0 0
      %454 = vmatprep.subr.bf16.mxu0 0
      %455 = vmatpush1.bf16.msra.mxu0 0
      %456 = vmatprep.subr.bf16.mxu0 0
      %457 = vmatpush1.bf16.msra.mxu0 0
      %458 = vmatprep.subr.bf16.mxu0 0
      %459 = vmatpush1.bf16.msra.mxu0 0
      %460 = vmatprep.subr.bf16.mxu0 0
      %461 = vmatpush1.bf16.msra.mxu0 0
      %462 = vmatprep.subr.bf16.mxu0 0
      %463 = vmatpush1.bf16.msra.mxu0 0
      %464 = vmatprep.subr.bf16.mxu0 0
      %465 = vmatpush1.bf16.msra.mxu0 0
      %466 = vmatprep.subr.bf16.mxu0 0
      %467 = vmatpush1.bf16.msra.mxu0 0
      %468 = vmatprep.subr.bf16.mxu0 0
      %469 = vmatpush1.bf16.msra.mxu0 0
      %470 = vmatprep.subr.bf16.mxu0 0
      %471 = vmatpush1.bf16.msra.mxu0 0
      %472 = vmatprep.subr.bf16.mxu0 0
      %473 = vmatpush1.bf16.msra.mxu0 0
      %474 = vmatprep.subr.bf16.mxu0 0
      %475 = vmatpush1.bf16.msra.mxu0 0
      %476 = vmatprep.mubr.bf16.mxu0 0
      %477 = vmatmul.mubr.bf16.gmra.mrb[0].mxu0 %v429
      %v478 = vpop.f32.mrb[0].mxu0
      %v479 = vadd.f32 0.0, %v478
      %v480 = vpop.f32.mrb[0].mxu0
      %v481 = vpop.f32.mrb[0].mxu0
      %v482 = vadd.f32 0.0, %v481
      %v483 = vpop.f32.mrb[0].mxu0
      %484 = vmatprep.mubr.bf16.mxu0 0
      %485 = vmatmul.mubr.bf16.gmra.mrb[0].mxu0 %v432
      %v486 = vpop.f32.mrb[0].mxu0
      %v487 = vadd.f32 0.0, %v486
      %v488 = vpop.f32.mrb[0].mxu0
      %v489 = vpop.f32.mrb[0].mxu0
      %v490 = vadd.f32 0.0, %v489
      %v491 = vpop.f32.mrb[0].mxu0
      %492 = vmatprep.mubr.bf16.mxu0 0
      %493 = vmatmul.mubr.bf16.gmra.mrb[0].mxu0 %v435
      %v494 = vpop.f32.mrb[0].mxu0
      %v495 = vadd.f32 0.0, %v494
      %v496 = vpop.f32.mrb[0].mxu0
      %v497 = vpop.f32.mrb[0].mxu0
      %v498 = vadd.f32 0.0, %v497
      %v499 = vpop.f32.mrb[0].mxu0
      %500 = vmatprep.mubr.bf16.mxu0 0
      %501 = vmatmul.mubr.bf16.gmra.mrb[0].mxu0 %v438
      %v502 = vpop.f32.mrb[0].mxu0
      %v503 = vadd.f32 0.0, %v502
      %v504 = vpop.f32.mrb[0].mxu0
      %v505 = vpop.f32.mrb[0].mxu0
      %v506 = vadd.f32 0.0, %v505
      %v507 = vpop.f32.mrb[0].mxu0
      %508 = vdwg.mxu0
      %v510 = vsel %vm364, %v412, 0
      %v513 = vsel %vm364, %v413, 0
      %v516 = vsel %vm364, %v414, 0
      %v519 = vsel %vm364, %v415, 0
      %v522 = vsel %vm440, %v395, 0
      %524 = vmatprep.subr.bf16.mxu0 0
      %525 = vmatpush1.bf16.msra.mxu0 %v522
      %526 = vmatprep.subr.bf16.mxu0 0
      %527 = vmatpush1.bf16.msra.mxu0 0
      %528 = vmatprep.subr.bf16.mxu0 0
      %529 = vmatpush1.bf16.msra.mxu0 0
      %530 = vmatprep.subr.bf16.mxu0 0
      %531 = vmatpush1.bf16.msra.mxu0 0
      %532 = vmatprep.subr.bf16.mxu0 0
      %533 = vmatpush1.bf16.msra.mxu0 0
      %534 = vmatprep.subr.bf16.mxu0 0
      %535 = vmatpush1.bf16.msra.mxu0 0
      %536 = vmatprep.subr.bf16.mxu0 0
      %537 = vmatpush1.bf16.msra.mxu0 0
      %538 = vmatprep.subr.bf16.mxu0 0
      %539 = vmatpush1.bf16.msra.mxu0 0
      %540 = vmatprep.subr.bf16.mxu0 0
      %541 = vmatpush1.bf16.msra.mxu0 0
      %542 = vmatprep.subr.bf16.mxu0 0
      %543 = vmatpush1.bf16.msra.mxu0 0
      %544 = vmatprep.subr.bf16.mxu0 0
      %545 = vmatpush1.bf16.msra.mxu0 0
      %546 = vmatprep.subr.bf16.mxu0 0
      %547 = vmatpush1.bf16.msra.mxu0 0
      %548 = vmatprep.subr.bf16.mxu0 0
      %549 = vmatpush1.bf16.msra.mxu0 0
      %550 = vmatprep.subr.bf16.mxu0 0
      %551 = vmatpush1.bf16.msra.mxu0 0
      %552 = vmatprep.subr.bf16.mxu0 0
      %553 = vmatpush1.bf16.msra.mxu0 0
      %554 = vmatprep.subr.bf16.mxu0 0
      %555 = vmatpush1.bf16.msra.mxu0 0
      %556 = vmatprep.mubr.bf16.mxu0 0
      %557 = vmatmul.mubr.bf16.gmra.mrb[0].mxu0 %v510
      %v558 = vpop.f32.mrb[0].mxu0
      %v559 = vadd.f32 %v479, %v558
      %v560 = vpop.f32.mrb[0].mxu0
      %v561 = vpop.f32.mrb[0].mxu0
      %v562 = vadd.f32 %v482, %v561
      %v563 = vpop.f32.mrb[0].mxu0
      %564 = vmatprep.mubr.bf16.mxu0 0
      %565 = vmatmul.mubr.bf16.gmra.mrb[0].mxu0 %v513
      %v566 = vpop.f32.mrb[0].mxu0
      %v567 = vadd.f32 %v487, %v566
      %v568 = vpop.f32.mrb[0].mxu0
      %v569 = vpop.f32.mrb[0].mxu0
      %v570 = vadd.f32 %v490, %v569
      %v571 = vpop.f32.mrb[0].mxu0
      %572 = vmatprep.mubr.bf16.mxu0 0
      %573 = vmatmul.mubr.bf16.gmra.mrb[0].mxu0 %v516
      %v574 = vpop.f32.mrb[0].mxu0
      %v575 = vadd.f32 %v495, %v574
      %v576 = vpop.f32.mrb[0].mxu0
      %v577 = vpop.f32.mrb[0].mxu0
      %v578 = vadd.f32 %v498, %v577
      %v579 = vpop.f32.mrb[0].mxu0
      %580 = vmatprep.mubr.bf16.mxu0 0
      %581 = vmatmul.mubr.bf16.gmra.mrb[0].mxu0 %v519
      %v582 = vpop.f32.mrb[0].mxu0
      %v583 = vadd.f32 %v503, %v582
      %v584 = vpop.f32.mrb[0].mxu0
      %v585 = vpop.f32.mrb[0].mxu0
      %v586 = vadd.f32 %v506, %v585
      %v587 = vpop.f32.mrb[0].mxu0
      %588 = vdwg.mxu0
      %v589 = vld [vmem:[#allocation2 + $0x2] sm:$0xff]
      %v590 = vld [vmem:[#allocation2 + $0x12] sm:$0xff]
      %v591 = vld [vmem:[#allocation2 + $0x22] sm:$0xff]
      %v592 = vld [vmem:[#allocation2 + $0x32] sm:$0xff]
      %v593 = vld [vmem:[#allocation2 + $0x42] sm:$0xff]
      %v594 = vld [vmem:[#allocation2 + $0x52] sm:$0xff]
      %v595 = vld [vmem:[#allocation2 + $0x62] sm:$0xff]
      %v596 = vld [vmem:[#allocation2 + $0x72] sm:$0xff]
      %v597 = vpack.c.bf16 %v590, %v589
      %v598 = vpack.c.bf16 %v592, %v591
      %v599 = vpack.c.bf16 %v594, %v593
      %v600 = vpack.c.bf16 %v596, %v595
      %v602 = vsel %vm364, %v597, 0
      %v605 = vsel %vm364, %v598, 0
      %v608 = vsel %vm364, %v599, 0
      %v611 = vsel %vm364, %v600, 0
      %v614 = vsel %vm440, %v397, 0
      %616 = vmatprep.subr.bf16.mxu0 0
      %617 = vmatpush1.bf16.msra.mxu0 %v614
      %618 = vmatprep.subr.bf16.mxu0 0
      %619 = vmatpush1.bf16.msra.mxu0 0
      %620 = vmatprep.subr.bf16.mxu0 0
      %621 = vmatpush1.bf16.msra.mxu0 0
      %622 = vmatprep.subr.bf16.mxu0 0
      %623 = vmatpush1.bf16.msra.mxu0 0
      %624 = vmatprep.subr.bf16.mxu0 0
      %625 = vmatpush1.bf16.msra.mxu0 0
      %626 = vmatprep.subr.bf16.mxu0 0
      %627 = vmatpush1.bf16.msra.mxu0 0
      %628 = vmatprep.subr.bf16.mxu0 0
      %629 = vmatpush1.bf16.msra.mxu0 0
      %630 = vmatprep.subr.bf16.mxu0 0
      %631 = vmatpush1.bf16.msra.mxu0 0
      %632 = vmatprep.subr.bf16.mxu0 0
      %633 = vmatpush1.bf16.msra.mxu0 0
      %634 = vmatprep.subr.bf16.mxu0 0
      %635 = vmatpush1.bf16.msra.mxu0 0
      %636 = vmatprep.subr.bf16.mxu0 0
      %637 = vmatpush1.bf16.msra.mxu0 0
      %638 = vmatprep.subr.bf16.mxu0 0
      %639 = vmatpush1.bf16.msra.mxu0 0
      %640 = vmatprep.subr.bf16.mxu0 0
      %641 = vmatpush1.bf16.msra.mxu0 0
      %642 = vmatprep.subr.bf16.mxu0 0
      %643 = vmatpush1.bf16.msra.mxu0 0
      %644 = vmatprep.subr.bf16.mxu0 0
      %645 = vmatpush1.bf16.msra.mxu0 0
      %646 = vmatprep.subr.bf16.mxu0 0
      %647 = vmatpush1.bf16.msra.mxu0 0
      %648 = vmatprep.mubr.bf16.mxu0 0
      %649 = vmatmul.mubr.bf16.gmra.mrb[0].mxu0 %v602
      %v650 = vpop.f32.mrb[0].mxu0
      %v651 = vadd.f32 0.0, %v650
      %v652 = vpop.f32.mrb[0].mxu0
      %v653 = vpop.f32.mrb[0].mxu0
      %v654 = vadd.f32 0.0, %v653
      %v655 = vpop.f32.mrb[0].mxu0
      %656 = vmatprep.mubr.bf16.mxu0 0
      %657 = vmatmul.mubr.bf16.gmra.mrb[0].mxu0 %v605
      %v658 = vpop.f32.mrb[0].mxu0
      %v659 = vadd.f32 0.0, %v658
      %v660 = vpop.f32.mrb[0].mxu0
      %v661 = vpop.f32.mrb[0].mxu0
      %v662 = vadd.f32 0.0, %v661
      %v663 = vpop.f32.mrb[0].mxu0
      %664 = vmatprep.mubr.bf16.mxu0 0
      %665 = vmatmul.mubr.bf16.gmra.mrb[0].mxu0 %v608
      %v666 = vpop.f32.mrb[0].mxu0
      %v667 = vadd.f32 0.0, %v666
      %v668 = vpop.f32.mrb[0].mxu0
      %v669 = vpop.f32.mrb[0].mxu0
      %v670 = vadd.f32 0.0, %v669
      %v671 = vpop.f32.mrb[0].mxu0
      %672 = vmatprep.mubr.bf16.mxu0 0
      %673 = vmatmul.mubr.bf16.gmra.mrb[0].mxu0 %v611
      %v674 = vpop.f32.mrb[0].mxu0
      %v675 = vadd.f32 0.0, %v674
      %v676 = vpop.f32.mrb[0].mxu0
      %v677 = vpop.f32.mrb[0].mxu0
      %v678 = vadd.f32 0.0, %v677
      %v679 = vpop.f32.mrb[0].mxu0
      %680 = vdwg.mxu0
      %v681 = vadd.f32 %v559, %v651
      %v682 = vadd.f32 %v562, %v654
      %v683 = vadd.f32 %v567, %v659
      %v684 = vadd.f32 %v570, %v662
      %v685 = vadd.f32 %v575, %v667
      %v686 = vadd.f32 %v578, %v670
      %v687 = vadd.f32 %v583, %v675
      %v688 = vadd.f32 %v586, %v678
      %v689 = vld [vmem:[%s386] sm:$0xff]
      %v690 = vld [vmem:[%s386 + $0x10] sm:$0xff]
      %v691 = vld [vmem:[%s386 + $0x20] sm:$0xff]
      %v692 = vld [vmem:[%s386 + $0x30] sm:$0xff]
      %v693 = vld [vmem:[%s386 + $0x40] sm:$0xff]
      %v694 = vld [vmem:[%s386 + $0x50] sm:$0xff]
      %v695 = vld [vmem:[%s386 + $0x60] sm:$0xff]
      %v696 = vld [vmem:[%s386 + $0x70] sm:$0xff]
      %v697 = vpack.c.bf16 %v690, %v689
      %v698 = vpack.c.bf16 %v692, %v691
      %v699 = vpack.c.bf16 %v694, %v693
      %v700 = vpack.c.bf16 %v696, %v695
      %v702 = vsel %vm364, %v697, 0
      %v705 = vsel %vm364, %v698, 0
      %v708 = vsel %vm364, %v699, 0
      %v711 = vsel %vm364, %v700, 0
      %v714 = vsel %vm440, %v398, 0
      %716 = vmatprep.subr.bf16.mxu0 0
      %717 = vmatpush1.bf16.msra.mxu0 %v714
      %718 = vmatprep.subr.bf16.mxu0 0
      %719 = vmatpush1.bf16.msra.mxu0 0
      %720 = vmatprep.subr.bf16.mxu0 0
      %721 = vmatpush1.bf16.msra.mxu0 0
      %722 = vmatprep.subr.bf16.mxu0 0
      %723 = vmatpush1.bf16.msra.mxu0 0
      %724 = vmatprep.subr.bf16.mxu0 0
      %725 = vmatpush1.bf16.msra.mxu0 0
      %726 = vmatprep.subr.bf16.mxu0 0
      %727 = vmatpush1.bf16.msra.mxu0 0
      %728 = vmatprep.subr.bf16.mxu0 0
      %729 = vmatpush1.bf16.msra.mxu0 0
      %730 = vmatprep.subr.bf16.mxu0 0
      %731 = vmatpush1.bf16.msra.mxu0 0
      %732 = vmatprep.subr.bf16.mxu0 0
      %733 = vmatpush1.bf16.msra.mxu0 0
      %734 = vmatprep.subr.bf16.mxu0 0
      %735 = vmatpush1.bf16.msra.mxu0 0
      %736 = vmatprep.subr.bf16.mxu0 0
      %737 = vmatpush1.bf16.msra.mxu0 0
      %738 = vmatprep.subr.bf16.mxu0 0
      %739 = vmatpush1.bf16.msra.mxu0 0
      %740 = vmatprep.subr.bf16.mxu0 0
      %741 = vmatpush1.bf16.msra.mxu0 0
      %742 = vmatprep.subr.bf16.mxu0 0
      %743 = vmatpush1.bf16.msra.mxu0 0
      %744 = vmatprep.subr.bf16.mxu0 0
      %745 = vmatpush1.bf16.msra.mxu0 0
      %746 = vmatprep.subr.bf16.mxu0 0
      %747 = vmatpush1.bf16.msra.mxu0 0
      %748 = vmatprep.mubr.bf16.mxu0 0
      %749 = vmatmul.mubr.bf16.gmra.mrb[0].mxu0 %v702
      %v750 = vpop.f32.mrb[0].mxu0
      %v751 = vadd.f32 0.0, %v750
      %v752 = vpop.f32.mrb[0].mxu0
      %v753 = vpop.f32.mrb[0].mxu0
      %v754 = vadd.f32 0.0, %v753
      %v755 = vpop.f32.mrb[0].mxu0
      %756 = vmatprep.mubr.bf16.mxu0 0
      %757 = vmatmul.mubr.bf16.gmra.mrb[0].mxu0 %v705
      %v758 = vpop.f32.mrb[0].mxu0
      %v759 = vadd.f32 0.0, %v758
      %v760 = vpop.f32.mrb[0].mxu0
      %v761 = vpop.f32.mrb[0].mxu0
      %v762 = vadd.f32 0.0, %v761
      %v763 = vpop.f32.mrb[0].mxu0
      %764 = vmatprep.mubr.bf16.mxu0 0
      %765 = vmatmul.mubr.bf16.gmra.mrb[0].mxu0 %v708
      %v766 = vpop.f32.mrb[0].mxu0
      %v767 = vadd.f32 0.0, %v766
      %v768 = vpop.f32.mrb[0].mxu0
      %v769 = vpop.f32.mrb[0].mxu0
      %v770 = vadd.f32 0.0, %v769
      %v771 = vpop.f32.mrb[0].mxu0
      %772 = vmatprep.mubr.bf16.mxu0 0
      %773 = vmatmul.mubr.bf16.gmra.mrb[0].mxu0 %v711
      %v774 = vpop.f32.mrb[0].mxu0
      %v775 = vadd.f32 0.0, %v774
      %v776 = vpop.f32.mrb[0].mxu0
      %v777 = vpop.f32.mrb[0].mxu0
      %v778 = vadd.f32 0.0, %v777
      %v779 = vpop.f32.mrb[0].mxu0
      %780 = vdwg.mxu0
      %v781 = vadd.f32 %v681, %v751
      %v782 = vadd.f32 %v682, %v754
      %v783 = vadd.f32 %v683, %v759
      %v784 = vadd.f32 %v684, %v762
      %v785 = vadd.f32 %v685, %v767
      %v786 = vadd.f32 %v686, %v770
      %v787 = vadd.f32 %v687, %v775
      %v788 = vadd.f32 %v688, %v778
      %v789 = vld [vmem:[%s386 + $0x1] sm:$0xff]
      %v790 = vld [vmem:[%s386 + $0x11] sm:$0xff]
      %v791 = vld [vmem:[%s386 + $0x21] sm:$0xff]
      %v792 = vld [vmem:[%s386 + $0x31] sm:$0xff]
      %v793 = vld [vmem:[%s386 + $0x41] sm:$0xff]
      %v794 = vld [vmem:[%s386 + $0x51] sm:$0xff]
      %v795 = vld [vmem:[%s386 + $0x61] sm:$0xff]
      %v796 = vld [vmem:[%s386 + $0x71] sm:$0xff]
      %v797 = vpack.c.bf16 %v790, %v789
      %v798 = vpack.c.bf16 %v792, %v791
      %v799 = vpack.c.bf16 %v794, %v793
      %v800 = vpack.c.bf16 %v796, %v795
      %v802 = vsel %vm364, %v797, 0
      %v805 = vsel %vm364, %v798, 0
      %v808 = vsel %vm364, %v799, 0
      %v811 = vsel %vm364, %v800, 0
      %v814 = vsel %vm440, %v399, 0
      %816 = vmatprep.subr.bf16.mxu0 0
      %817 = vmatpush1.bf16.msra.mxu0 %v814
      %818 = vmatprep.subr.bf16.mxu0 0
      %819 = vmatpush1.bf16.msra.mxu0 0
      %820 = vmatprep.subr.bf16.mxu0 0
      %821 = vmatpush1.bf16.msra.mxu0 0
      %822 = vmatprep.subr.bf16.mxu0 0
      %823 = vmatpush1.bf16.msra.mxu0 0
      %824 = vmatprep.subr.bf16.mxu0 0
      %825 = vmatpush1.bf16.msra.mxu0 0
      %826 = vmatprep.subr.bf16.mxu0 0
      %827 = vmatpush1.bf16.msra.mxu0 0
      %828 = vmatprep.subr.bf16.mxu0 0
      %829 = vmatpush1.bf16.msra.mxu0 0
      %830 = vmatprep.subr.bf16.mxu0 0
      %831 = vmatpush1.bf16.msra.mxu0 0
      %832 = vmatprep.subr.bf16.mxu0 0
      %833 = vmatpush1.bf16.msra.mxu0 0
      %834 = vmatprep.subr.bf16.mxu0 0
      %835 = vmatpush1.bf16.msra.mxu0 0
      %836 = vmatprep.subr.bf16.mxu0 0
      %837 = vmatpush1.bf16.msra.mxu0 0
      %838 = vmatprep.subr.bf16.mxu0 0
      %839 = vmatpush1.bf16.msra.mxu0 0
      %840 = vmatprep.subr.bf16.mxu0 0
      %841 = vmatpush1.bf16.msra.mxu0 0
      %842 = vmatprep.subr.bf16.mxu0 0
      %843 = vmatpush1.bf16.msra.mxu0 0
      %844 = vmatprep.subr.bf16.mxu0 0
      %845 = vmatpush1.bf16.msra.mxu0 0
      %846 = vmatprep.subr.bf16.mxu0 0
      %847 = vmatpush1.bf16.msra.mxu0 0
      %848 = vmatprep.mubr.bf16.mxu0 0
      %849 = vmatmul.mubr.bf16.gmra.mrb[0].mxu0 %v802
      %v850 = vpop.f32.mrb[0].mxu0
      %v851 = vadd.f32 0.0, %v850
      %v852 = vpop.f32.mrb[0].mxu0
      %v853 = vpop.f32.mrb[0].mxu0
      %v854 = vadd.f32 0.0, %v853
      %v855 = vpop.f32.mrb[0].mxu0
      %856 = vmatprep.mubr.bf16.mxu0 0
      %857 = vmatmul.mubr.bf16.gmra.mrb[0].mxu0 %v805
      %v858 = vpop.f32.mrb[0].mxu0
      %v859 = vadd.f32 0.0, %v858
      %v860 = vpop.f32.mrb[0].mxu0
      %v861 = vpop.f32.mrb[0].mxu0
      %v862 = vadd.f32 0.0, %v861
      %v863 = vpop.f32.mrb[0].mxu0
      %864 = vmatprep.mubr.bf16.mxu0 0
      %865 = vmatmul.mubr.bf16.gmra.mrb[0].mxu0 %v808
      %v866 = vpop.f32.mrb[0].mxu0
      %v867 = vadd.f32 0.0, %v866
      %v868 = vpop.f32.mrb[0].mxu0
      %v869 = vpop.f32.mrb[0].mxu0
      %v870 = vadd.f32 0.0, %v869
      %v871 = vpop.f32.mrb[0].mxu0
      %872 = vmatprep.mubr.bf16.mxu0 0
      %873 = vmatmul.mubr.bf16.gmra.mrb[0].mxu0 %v811
      %v874 = vpop.f32.mrb[0].mxu0
      %v875 = vadd.f32 0.0, %v874
      %v876 = vpop.f32.mrb[0].mxu0
      %v877 = vpop.f32.mrb[0].mxu0
      %v878 = vadd.f32 0.0, %v877
      %v879 = vpop.f32.mrb[0].mxu0
      %880 = vdwg.mxu0
      %v881 = vadd.f32 %v781, %v851
      %v882 = vadd.f32 %v782, %v854
      %v883 = vadd.f32 %v783, %v859
      %v884 = vadd.f32 %v784, %v862
      %v885 = vadd.f32 %v785, %v867
      %v886 = vadd.f32 %v786, %v870
      %v887 = vadd.f32 %v787, %v875
      %v888 = vadd.f32 %v788, %v878
      %v889 = vld [vmem:[%s386 + $0x2] sm:$0xff]
      %v890 = vld [vmem:[%s386 + $0x12] sm:$0xff]
      %v891 = vld [vmem:[%s386 + $0x22] sm:$0xff]
      %v892 = vld [vmem:[%s386 + $0x32] sm:$0xff]
      %v893 = vld [vmem:[%s386 + $0x42] sm:$0xff]
      %v894 = vld [vmem:[%s386 + $0x52] sm:$0xff]
      %v895 = vld [vmem:[%s386 + $0x62] sm:$0xff]
      %v896 = vld [vmem:[%s386 + $0x72] sm:$0xff]
      %v897 = vpack.c.bf16 %v890, %v889
      %v898 = vpack.c.bf16 %v892, %v891
      %v899 = vpack.c.bf16 %v894, %v893
      %v900 = vpack.c.bf16 %v896, %v895
      %v902 = vsel %vm364, %v897, 0
      %v905 = vsel %vm364, %v898, 0
      %v908 = vsel %vm364, %v899, 0
      %v911 = vsel %vm364, %v900, 0
      %v914 = vsel %vm440, %v400, 0
      %916 = vmatprep.subr.bf16.mxu0 0
      %917 = vmatpush1.bf16.msra.mxu0 %v914
      %918 = vmatprep.subr.bf16.mxu0 0
      %919 = vmatpush1.bf16.msra.mxu0 0
      %920 = vmatprep.subr.bf16.mxu0 0
      %921 = vmatpush1.bf16.msra.mxu0 0
      %922 = vmatprep.subr.bf16.mxu0 0
      %923 = vmatpush1.bf16.msra.mxu0 0
      %924 = vmatprep.subr.bf16.mxu0 0
      %925 = vmatpush1.bf16.msra.mxu0 0
      %926 = vmatprep.subr.bf16.mxu0 0
      %927 = vmatpush1.bf16.msra.mxu0 0
      %928 = vmatprep.subr.bf16.mxu0 0
      %929 = vmatpush1.bf16.msra.mxu0 0
      %930 = vmatprep.subr.bf16.mxu0 0
      %931 = vmatpush1.bf16.msra.mxu0 0
      %932 = vmatprep.subr.bf16.mxu0 0
      %933 = vmatpush1.bf16.msra.mxu0 0
      %934 = vmatprep.subr.bf16.mxu0 0
      %935 = vmatpush1.bf16.msra.mxu0 0
      %936 = vmatprep.subr.bf16.mxu0 0
      %937 = vmatpush1.bf16.msra.mxu0 0
      %938 = vmatprep.subr.bf16.mxu0 0
      %939 = vmatpush1.bf16.msra.mxu0 0
      %940 = vmatprep.subr.bf16.mxu0 0
      %941 = vmatpush1.bf16.msra.mxu0 0
      %942 = vmatprep.subr.bf16.mxu0 0
      %943 = vmatpush1.bf16.msra.mxu0 0
      %944 = vmatprep.subr.bf16.mxu0 0
      %945 = vmatpush1.bf16.msra.mxu0 0
      %946 = vmatprep.subr.bf16.mxu0 0
      %947 = vmatpush1.bf16.msra.mxu0 0
      %948 = vmatprep.mubr.bf16.mxu0 0
      %949 = vmatmul.mubr.bf16.gmra.mrb[0].mxu0 %v902
      %v950 = vpop.f32.mrb[0].mxu0
      %v951 = vadd.f32 0.0, %v950
      %v952 = vpop.f32.mrb[0].mxu0
      %v953 = vpop.f32.mrb[0].mxu0
      %v954 = vadd.f32 0.0, %v953
      %v955 = vpop.f32.mrb[0].mxu0
      %956 = vmatprep.mubr.bf16.mxu0 0
      %957 = vmatmul.mubr.bf16.gmra.mrb[0].mxu0 %v905
      %v958 = vpop.f32.mrb[0].mxu0
      %v959 = vadd.f32 0.0, %v958
      %v960 = vpop.f32.mrb[0].mxu0
      %v961 = vpop.f32.mrb[0].mxu0
      %v962 = vadd.f32 0.0, %v961
      %v963 = vpop.f32.mrb[0].mxu0
      %964 = vmatprep.mubr.bf16.mxu0 0
      %965 = vmatmul.mubr.bf16.gmra.mrb[0].mxu0 %v908
      %v966 = vpop.f32.mrb[0].mxu0
      %v967 = vadd.f32 0.0, %v966
      %v968 = vpop.f32.mrb[0].mxu0
      %v969 = vpop.f32.mrb[0].mxu0
      %v970 = vadd.f32 0.0, %v969
      %v971 = vpop.f32.mrb[0].mxu0
      %972 = vmatprep.mubr.bf16.mxu0 0
      %973 = vmatmul.mubr.bf16.gmra.mrb[0].mxu0 %v911
      %v974 = vpop.f32.mrb[0].mxu0
      %v975 = vadd.f32 0.0, %v974
      %v976 = vpop.f32.mrb[0].mxu0
      %v977 = vpop.f32.mrb[0].mxu0
      %v978 = vadd.f32 0.0, %v977
      %v979 = vpop.f32.mrb[0].mxu0
      %980 = vdwg.mxu0
      %v981 = vadd.f32 %v881, %v951
      %v982 = vadd.f32 %v882, %v954
      %v983 = vadd.f32 %v883, %v959
      %v984 = vadd.f32 %v884, %v962
      %v985 = vadd.f32 %v885, %v967
      %v986 = vadd.f32 %v886, %v970
      %v987 = vadd.f32 %v887, %v975
      %v988 = vadd.f32 %v888, %v978
      %s989 = scalar_lea.vmem [#allocation2], 32
      %v990 = vld [vmem:[%s989] sm:$0xff]
      %v991 = vld [vmem:[%s989 + $0x10] sm:$0xff]
      %v992 = vld [vmem:[%s989 + $0x20] sm:$0xff]
      %v993 = vld [vmem:[%s989 + $0x30] sm:$0xff]
      %v994 = vld [vmem:[%s989 + $0x40] sm:$0xff]
      %v995 = vld [vmem:[%s989 + $0x50] sm:$0xff]
      %v996 = vld [vmem:[%s989 + $0x60] sm:$0xff]
      %v997 = vld [vmem:[%s989 + $0x70] sm:$0xff]
      %v998 = vpack.c.bf16 %v991, %v990
      %v999 = vpack.c.bf16 %v993, %v992
      %v1000 = vpack.c.bf16 %v995, %v994
      %v1001 = vpack.c.bf16 %v997, %v996
      %v1003 = vsel %vm364, %v998, 0
      %v1006 = vsel %vm364, %v999, 0
      %v1009 = vsel %vm364, %v1000, 0
      %v1012 = vsel %vm364, %v1001, 0
      %v1015 = vsel %vm440, %v401, 0
      %1017 = vmatprep.subr.bf16.mxu0 0
      %1018 = vmatpush1.bf16.msra.mxu0 %v1015
      %1019 = vmatprep.subr.bf16.mxu0 0
      %1020 = vmatpush1.bf16.msra.mxu0 0
      %1021 = vmatprep.subr.bf16.mxu0 0
      %1022 = vmatpush1.bf16.msra.mxu0 0
      %1023 = vmatprep.subr.bf16.mxu0 0
      %1024 = vmatpush1.bf16.msra.mxu0 0
      %1025 = vmatprep.subr.bf16.mxu0 0
      %1026 = vmatpush1.bf16.msra.mxu0 0
      %1027 = vmatprep.subr.bf16.mxu0 0
      %1028 = vmatpush1.bf16.msra.mxu0 0
      %1029 = vmatprep.subr.bf16.mxu0 0
      %1030 = vmatpush1.bf16.msra.mxu0 0
      %1031 = vmatprep.subr.bf16.mxu0 0
      %1032 = vmatpush1.bf16.msra.mxu0 0
      %1033 = vmatprep.subr.bf16.mxu0 0
      %1034 = vmatpush1.bf16.msra.mxu0 0
      %1035 = vmatprep.subr.bf16.mxu0 0
      %1036 = vmatpush1.bf16.msra.mxu0 0
      %1037 = vmatprep.subr.bf16.mxu0 0
      %1038 = vmatpush1.bf16.msra.mxu0 0
      %1039 = vmatprep.subr.bf16.mxu0 0
      %1040 = vmatpush1.bf16.msra.mxu0 0
      %1041 = vmatprep.subr.bf16.mxu0 0
      %1042 = vmatpush1.bf16.msra.mxu0 0
      %1043 = vmatprep.subr.bf16.mxu0 0
      %1044 = vmatpush1.bf16.msra.mxu0 0
      %1045 = vmatprep.subr.bf16.mxu0 0
      %1046 = vmatpush1.bf16.msra.mxu0 0
      %1047 = vmatprep.subr.bf16.mxu0 0
      %1048 = vmatpush1.bf16.msra.mxu0 0
      %1049 = vmatprep.mubr.bf16.mxu0 0
      %1050 = vmatmul.mubr.bf16.gmra.mrb[0].mxu0 %v1003
      %v1051 = vpop.f32.mrb[0].mxu0
      %v1052 = vadd.f32 0.0, %v1051
      %v1053 = vpop.f32.mrb[0].mxu0
      %v1054 = vpop.f32.mrb[0].mxu0
      %v1055 = vadd.f32 0.0, %v1054
      %v1056 = vpop.f32.mrb[0].mxu0
      %1057 = vmatprep.mubr.bf16.mxu0 0
      %1058 = vmatmul.mubr.bf16.gmra.mrb[0].mxu0 %v1006
      %v1059 = vpop.f32.mrb[0].mxu0
      %v1060 = vadd.f32 0.0, %v1059
      %v1061 = vpop.f32.mrb[0].mxu0
      %v1062 = vpop.f32.mrb[0].mxu0
      %v1063 = vadd.f32 0.0, %v1062
      %v1064 = vpop.f32.mrb[0].mxu0
      %1065 = vmatprep.mubr.bf16.mxu0 0
      %1066 = vmatmul.mubr.bf16.gmra.mrb[0].mxu0 %v1009
      %v1067 = vpop.f32.mrb[0].mxu0
      %v1068 = vadd.f32 0.0, %v1067
      %v1069 = vpop.f32.mrb[0].mxu0
      %v1070 = vpop.f32.mrb[0].mxu0
      %v1071 = vadd.f32 0.0, %v1070
      %v1072 = vpop.f32.mrb[0].mxu0
      %1073 = vmatprep.mubr.bf16.mxu0 0
      %1074 = vmatmul.mubr.bf16.gmra.mrb[0].mxu0 %v1012
      %v1075 = vpop.f32.mrb[0].mxu0
      %v1076 = vadd.f32 0.0, %v1075
      %v1077 = vpop.f32.mrb[0].mxu0
      %v1078 = vpop.f32.mrb[0].mxu0
      %v1079 = vadd.f32 0.0, %v1078
      %v1080 = vpop.f32.mrb[0].mxu0
      %1081 = vdwg.mxu0
      %v1082 = vadd.f32 %v981, %v1052
      %v1083 = vadd.f32 %v982, %v1055
      %v1084 = vadd.f32 %v983, %v1060
      %v1085 = vadd.f32 %v984, %v1063
      %v1086 = vadd.f32 %v985, %v1068
      %v1087 = vadd.f32 %v986, %v1071
      %v1088 = vadd.f32 %v987, %v1076
      %v1089 = vadd.f32 %v988, %v1079
      %v1090 = vld [vmem:[%s989 + $0x1] sm:$0xff]
      %v1091 = vld [vmem:[%s989 + $0x11] sm:$0xff]
      %v1092 = vld [vmem:[%s989 + $0x21] sm:$0xff]
      %v1093 = vld [vmem:[%s989 + $0x31] sm:$0xff]
      %v1094 = vld [vmem:[%s989 + $0x41] sm:$0xff]
      %v1095 = vld [vmem:[%s989 + $0x51] sm:$0xff]
      %v1096 = vld [vmem:[%s989 + $0x61] sm:$0xff]
      %v1097 = vld [vmem:[%s989 + $0x71] sm:$0xff]
      %v1098 = vpack.c.bf16 %v1091, %v1090
      %v1099 = vpack.c.bf16 %v1093, %v1092
      %v1100 = vpack.c.bf16 %v1095, %v1094
      %v1101 = vpack.c.bf16 %v1097, %v1096
      %v1103 = vsel %vm364, %v1098, 0
      %v1106 = vsel %vm364, %v1099, 0
      %v1109 = vsel %vm364, %v1100, 0
      %v1112 = vsel %vm364, %v1101, 0
      %v1115 = vsel %vm440, %v402, 0
      %1117 = vmatprep.subr.bf16.mxu0 0
      %1118 = vmatpush1.bf16.msra.mxu0 %v1115
      %1119 = vmatprep.subr.bf16.mxu0 0
      %1120 = vmatpush1.bf16.msra.mxu0 0
      %1121 = vmatprep.subr.bf16.mxu0 0
      %1122 = vmatpush1.bf16.msra.mxu0 0
      %1123 = vmatprep.subr.bf16.mxu0 0
      %1124 = vmatpush1.bf16.msra.mxu0 0
      %1125 = vmatprep.subr.bf16.mxu0 0
      %1126 = vmatpush1.bf16.msra.mxu0 0
      %1127 = vmatprep.subr.bf16.mxu0 0
      %1128 = vmatpush1.bf16.msra.mxu0 0
      %1129 = vmatprep.subr.bf16.mxu0 0
      %1130 = vmatpush1.bf16.msra.mxu0 0
      %1131 = vmatprep.subr.bf16.mxu0 0
      %1132 = vmatpush1.bf16.msra.mxu0 0
      %1133 = vmatprep.subr.bf16.mxu0 0
      %1134 = vmatpush1.bf16.msra.mxu0 0
      %1135 = vmatprep.subr.bf16.mxu0 0
      %1136 = vmatpush1.bf16.msra.mxu0 0
      %1137 = vmatprep.subr.bf16.mxu0 0
      %1138 = vmatpush1.bf16.msra.mxu0 0
      %1139 = vmatprep.subr.bf16.mxu0 0
      %1140 = vmatpush1.bf16.msra.mxu0 0
      %1141 = vmatprep.subr.bf16.mxu0 0
      %1142 = vmatpush1.bf16.msra.mxu0 0
      %1143 = vmatprep.subr.bf16.mxu0 0
      %1144 = vmatpush1.bf16.msra.mxu0 0
      %1145 = vmatprep.subr.bf16.mxu0 0
      %1146 = vmatpush1.bf16.msra.mxu0 0
      %1147 = vmatprep.subr.bf16.mxu0 0
      %1148 = vmatpush1.bf16.msra.mxu0 0
      %1149 = vmatprep.mubr.bf16.mxu0 0
      %1150 = vmatmul.mubr.bf16.gmra.mrb[0].mxu0 %v1103
      %v1151 = vpop.f32.mrb[0].mxu0
      %v1152 = vadd.f32 0.0, %v1151
      %v1153 = vpop.f32.mrb[0].mxu0
      %v1154 = vpop.f32.mrb[0].mxu0
      %v1155 = vadd.f32 0.0, %v1154
      %v1156 = vpop.f32.mrb[0].mxu0
      %1157 = vmatprep.mubr.bf16.mxu0 0
      %1158 = vmatmul.mubr.bf16.gmra.mrb[0].mxu0 %v1106
      %v1159 = vpop.f32.mrb[0].mxu0
      %v1160 = vadd.f32 0.0, %v1159
      %v1161 = vpop.f32.mrb[0].mxu0
      %v1162 = vpop.f32.mrb[0].mxu0
      %v1163 = vadd.f32 0.0, %v1162
      %v1164 = vpop.f32.mrb[0].mxu0
      %1165 = vmatprep.mubr.bf16.mxu0 0
      %1166 = vmatmul.mubr.bf16.gmra.mrb[0].mxu0 %v1109
      %v1167 = vpop.f32.mrb[0].mxu0
      %v1168 = vadd.f32 0.0, %v1167
      %v1169 = vpop.f32.mrb[0].mxu0
      %v1170 = vpop.f32.mrb[0].mxu0
      %v1171 = vadd.f32 0.0, %v1170
      %v1172 = vpop.f32.mrb[0].mxu0
      %1173 = vmatprep.mubr.bf16.mxu0 0
      %1174 = vmatmul.mubr.bf16.gmra.mrb[0].mxu0 %v1112
      %v1175 = vpop.f32.mrb[0].mxu0
      %v1176 = vadd.f32 0.0, %v1175
      %v1177 = vpop.f32.mrb[0].mxu0
      %v1178 = vpop.f32.mrb[0].mxu0
      %v1179 = vadd.f32 0.0, %v1178
      %v1180 = vpop.f32.mrb[0].mxu0
      %1181 = vdwg.mxu0
      %v1182 = vadd.f32 %v1082, %v1152
      %v1183 = vadd.f32 %v1083, %v1155
      %v1184 = vadd.f32 %v1084, %v1160
      %v1185 = vadd.f32 %v1085, %v1163
      %v1186 = vadd.f32 %v1086, %v1168
      %v1187 = vadd.f32 %v1087, %v1171
      %v1188 = vadd.f32 %v1088, %v1176
      %v1189 = vadd.f32 %v1089, %v1179
      %v1190 = vld [vmem:[%s989 + $0x2] sm:$0xff]
      %v1191 = vld [vmem:[%s989 + $0x12] sm:$0xff]
      %v1192 = vld [vmem:[%s989 + $0x22] sm:$0xff]
      %v1193 = vld [vmem:[%s989 + $0x32] sm:$0xff]
      %v1194 = vld [vmem:[%s989 + $0x42] sm:$0xff]
      %v1195 = vld [vmem:[%s989 + $0x52] sm:$0xff]
      %v1196 = vld [vmem:[%s989 + $0x62] sm:$0xff]
      %v1197 = vld [vmem:[%s989 + $0x72] sm:$0xff]
      %v1198 = vpack.c.bf16 %v1191, %v1190
      %v1199 = vpack.c.bf16 %v1193, %v1192
      %v1200 = vpack.c.bf16 %v1195, %v1194
      %v1201 = vpack.c.bf16 %v1197, %v1196
      %v1203 = vsel %vm364, %v1198, 0
      %v1206 = vsel %vm364, %v1199, 0
      %v1209 = vsel %vm364, %v1200, 0
      %v1212 = vsel %vm364, %v1201, 0
      %v1215 = vsel %vm440, %v403, 0
      %1217 = vmatprep.subr.bf16.mxu0 0
      %1218 = vmatpush1.bf16.msra.mxu0 %v1215
      %1219 = vmatprep.subr.bf16.mxu0 0
      %1220 = vmatpush1.bf16.msra.mxu0 0
      %1221 = vmatprep.subr.bf16.mxu0 0
      %1222 = vmatpush1.bf16.msra.mxu0 0
      %1223 = vmatprep.subr.bf16.mxu0 0
      %1224 = vmatpush1.bf16.msra.mxu0 0
      %1225 = vmatprep.subr.bf16.mxu0 0
      %1226 = vmatpush1.bf16.msra.mxu0 0
      %1227 = vmatprep.subr.bf16.mxu0 0
      %1228 = vmatpush1.bf16.msra.mxu0 0
      %1229 = vmatprep.subr.bf16.mxu0 0
      %1230 = vmatpush1.bf16.msra.mxu0 0
      %1231 = vmatprep.subr.bf16.mxu0 0
      %1232 = vmatpush1.bf16.msra.mxu0 0
      %1233 = vmatprep.subr.bf16.mxu0 0
      %1234 = vmatpush1.bf16.msra.mxu0 0
      %1235 = vmatprep.subr.bf16.mxu0 0
      %1236 = vmatpush1.bf16.msra.mxu0 0
      %1237 = vmatprep.subr.bf16.mxu0 0
      %1238 = vmatpush1.bf16.msra.mxu0 0
      %1239 = vmatprep.subr.bf16.mxu0 0
      %1240 = vmatpush1.bf16.msra.mxu0 0
      %1241 = vmatprep.subr.bf16.mxu0 0
      %1242 = vmatpush1.bf16.msra.mxu0 0
      %1243 = vmatprep.subr.bf16.mxu0 0
      %1244 = vmatpush1.bf16.msra.mxu0 0
      %1245 = vmatprep.subr.bf16.mxu0 0
      %1246 = vmatpush1.bf16.msra.mxu0 0
      %1247 = vmatprep.subr.bf16.mxu0 0
      %1248 = vmatpush1.bf16.msra.mxu0 0
      %1249 = vmatprep.mubr.bf16.mxu0 0
      %1250 = vmatmul.mubr.bf16.gmra.mrb[0].mxu0 %v1203
      %v1251 = vpop.f32.mrb[0].mxu0
      %v1252 = vadd.f32 0.0, %v1251
      %v1253 = vpop.f32.mrb[0].mxu0
      %v1254 = vpop.f32.mrb[0].mxu0
      %v1255 = vadd.f32 0.0, %v1254
      %v1256 = vpop.f32.mrb[0].mxu0
      %1257 = vmatprep.mubr.bf16.mxu0 0
      %1258 = vmatmul.mubr.bf16.gmra.mrb[0].mxu0 %v1206
      %v1259 = vpop.f32.mrb[0].mxu0
      %v1260 = vadd.f32 0.0, %v1259
      %v1261 = vpop.f32.mrb[0].mxu0
      %v1262 = vpop.f32.mrb[0].mxu0
      %v1263 = vadd.f32 0.0, %v1262
      %v1264 = vpop.f32.mrb[0].mxu0
      %1265 = vmatprep.mubr.bf16.mxu0 0
      %1266 = vmatmul.mubr.bf16.gmra.mrb[0].mxu0 %v1209
      %v1267 = vpop.f32.mrb[0].mxu0
      %v1268 = vadd.f32 0.0, %v1267
      %v1269 = vpop.f32.mrb[0].mxu0
      %v1270 = vpop.f32.mrb[0].mxu0
      %v1271 = vadd.f32 0.0, %v1270
      %v1272 = vpop.f32.mrb[0].mxu0
      %1273 = vmatprep.mubr.bf16.mxu0 0
      %1274 = vmatmul.mubr.bf16.gmra.mrb[0].mxu0 %v1212
      %v1275 = vpop.f32.mrb[0].mxu0
      %v1276 = vadd.f32 0.0, %v1275
      %v1277 = vpop.f32.mrb[0].mxu0
      %v1278 = vpop.f32.mrb[0].mxu0
      %v1279 = vadd.f32 0.0, %v1278
      %v1280 = vpop.f32.mrb[0].mxu0
      %1281 = vdwg.mxu0
      %v1282 = vadd.f32 %v1182, %v1252
      %v1283 = vadd.f32 %v1183, %v1255
      %v1284 = vadd.f32 %v1184, %v1260
      %v1285 = vadd.f32 %v1185, %v1263
      %v1286 = vadd.f32 %v1186, %v1268
      %v1287 = vadd.f32 %v1187, %v1271
      %v1288 = vadd.f32 %v1188, %v1276
      %v1289 = vadd.f32 %v1189, %v1279
      %v1290 = vld [vmem:[%s2] sm:$0x1]
      %v1292 = vlaneseq
      %v1293 = vshrl.u32 %v1292, 7
      %v1294 = vsub.s32 0, %v1293
      %v1295 = vrot.slane %v1290, %v1294
      %v1297 = vadd.f32 %v1282, %v1295
      %v1298 = vadd.f32 %v1283, %v1295
      %v1299 = vadd.f32 %v1284, %v1295
      %v1300 = vadd.f32 %v1285, %v1295
      %v1301 = vadd.f32 %v1286, %v1295
      %v1302 = vadd.f32 %v1287, %v1295
      %v1303 = vadd.f32 %v1288, %v1295
      %v1304 = vadd.f32 %v1289, %v1295
      %v1305 = vmul.f32 %v1297, 0.0
      %v1306 = vmul.f32 %v1298, 0.0
      %v1307 = vmul.f32 %v1299, 0.0
      %v1308 = vmul.f32 %v1300, 0.0
      %v1309 = vmul.f32 %v1301, 0.0
      %v1310 = vmul.f32 %v1302, 0.0
      %v1311 = vmul.f32 %v1303, 0.0
      %v1312 = vmul.f32 %v1304, 0.0
      %v1313 = vmul.f32 %v1305, 0.5002501
      %v1314 = vmul.f32 %v1306, 0.5002501
      %v1315 = vmul.f32 %v1307, 0.5002501
      %v1316 = vmul.f32 %v1308, 0.5002501
      %v1317 = vmul.f32 %v1309, 0.5002501
      %v1318 = vmul.f32 %v1310, 0.5002501
      %v1319 = vmul.f32 %v1311, 0.5002501
      %v1320 = vmul.f32 %v1312, 0.5002501
      %v1321 = vfloor.f32 %v1313
      %v1322 = vfloor.f32 %v1314
      %v1323 = vfloor.f32 %v1315
      %v1324 = vfloor.f32 %v1316
      %v1325 = vfloor.f32 %v1317
      %v1326 = vfloor.f32 %v1318
      %v1327 = vfloor.f32 %v1319
      %v1328 = vfloor.f32 %v1320
      %v1329 = vmul.f32 %v1321, 1.999
      %v1330 = vmul.f32 %v1322, 1.999
      %v1331 = vmul.f32 %v1323, 1.999
      %v1332 = vmul.f32 %v1324, 1.999
      %v1333 = vmul.f32 %v1325, 1.999
      %v1334 = vmul.f32 %v1326, 1.999
      %v1335 = vmul.f32 %v1327, 1.999
      %v1336 = vmul.f32 %v1328, 1.999
      %v1337 = vsub.f32 %v1305, %v1329
      %v1338 = vsub.f32 %v1306, %v1330
      %v1339 = vsub.f32 %v1307, %v1331
      %v1340 = vsub.f32 %v1308, %v1332
      %v1341 = vsub.f32 %v1309, %v1333
      %v1342 = vsub.f32 %v1310, %v1334
      %v1343 = vsub.f32 %v1311, %v1335
      %v1344 = vsub.f32 %v1312, %v1336
      %v1345 = vadd.f32 %v1337, %v1297
      %v1346 = vadd.f32 %v1338, %v1298
      %v1347 = vadd.f32 %v1339, %v1299
      %v1348 = vadd.f32 %v1340, %v1300
      %v1349 = vadd.f32 %v1341, %v1301
      %v1350 = vadd.f32 %v1342, %v1302
      %v1351 = vadd.f32 %v1343, %v1303
      %v1352 = vadd.f32 %v1344, %v1304
      %v1353 = vmul.f32 %v1297, 0.5002501
      %v1354 = vmul.f32 %v1298, 0.5002501
      %v1355 = vmul.f32 %v1299, 0.5002501
      %v1356 = vmul.f32 %v1300, 0.5002501
      %v1357 = vmul.f32 %v1301, 0.5002501
      %v1358 = vmul.f32 %v1302, 0.5002501
      %v1359 = vmul.f32 %v1303, 0.5002501
      %v1360 = vmul.f32 %v1304, 0.5002501
      %v1361 = vfloor.f32 %v1353
      %v1362 = vfloor.f32 %v1354
      %v1363 = vfloor.f32 %v1355
      %v1364 = vfloor.f32 %v1356
      %v1365 = vfloor.f32 %v1357
      %v1366 = vfloor.f32 %v1358
      %v1367 = vfloor.f32 %v1359
      %v1368 = vfloor.f32 %v1360
      %v1369 = vmul.f32 %v1361, 1.999
      %v1370 = vmul.f32 %v1362, 1.999
      %v1371 = vmul.f32 %v1363, 1.999
      %v1372 = vmul.f32 %v1364, 1.999
      %v1373 = vmul.f32 %v1365, 1.999
      %v1374 = vmul.f32 %v1366, 1.999
      %v1375 = vmul.f32 %v1367, 1.999
      %v1376 = vmul.f32 %v1368, 1.999
      %v1377 = vsub.f32 %v1297, %v1369
      %v1378 = vsub.f32 %v1298, %v1370
      %v1379 = vsub.f32 %v1299, %v1371
      %v1380 = vsub.f32 %v1300, %v1372
      %v1381 = vsub.f32 %v1301, %v1373
      %v1382 = vsub.f32 %v1302, %v1374
      %v1383 = vsub.f32 %v1303, %v1375
      %v1384 = vsub.f32 %v1304, %v1376
      %v1385 = vadd.f32 %v1377, %v1297
      %v1386 = vadd.f32 %v1378, %v1298
      %v1387 = vadd.f32 %v1379, %v1299
      %v1388 = vadd.f32 %v1380, %v1300
      %v1389 = vadd.f32 %v1381, %v1301
      %v1390 = vadd.f32 %v1382, %v1302
      %v1391 = vadd.f32 %v1383, %v1303
      %v1392 = vadd.f32 %v1384, %v1304
      %v1393 = vmul.f32 %v1297, 2.0
      %v1394 = vmul.f32 %v1298, 2.0
      %v1395 = vmul.f32 %v1299, 2.0
      %v1396 = vmul.f32 %v1300, 2.0
      %v1397 = vmul.f32 %v1301, 2.0
      %v1398 = vmul.f32 %v1302, 2.0
      %v1399 = vmul.f32 %v1303, 2.0
      %v1400 = vmul.f32 %v1304, 2.0
      %v1401 = vmul.f32 %v1393, 0.5002501
      %v1402 = vmul.f32 %v1394, 0.5002501
      %v1403 = vmul.f32 %v1395, 0.5002501
      %v1404 = vmul.f32 %v1396, 0.5002501
      %v1405 = vmul.f32 %v1397, 0.5002501
      %v1406 = vmul.f32 %v1398, 0.5002501
      %v1407 = vmul.f32 %v1399, 0.5002501
      %v1408 = vmul.f32 %v1400, 0.5002501
      %v1409 = vfloor.f32 %v1401
      %v1410 = vfloor.f32 %v1402
      %v1411 = vfloor.f32 %v1403
      %v1412 = vfloor.f32 %v1404
      %v1413 = vfloor.f32 %v1405
      %v1414 = vfloor.f32 %v1406
      %v1415 = vfloor.f32 %v1407
      %v1416 = vfloor.f32 %v1408
      %v1417 = vmul.f32 %v1409, 1.999
      %v1418 = vmul.f32 %v1410, 1.999
      %v1419 = vmul.f32 %v1411, 1.999
      %v1420 = vmul.f32 %v1412, 1.999
      %v1421 = vmul.f32 %v1413, 1.999
      %v1422 = vmul.f32 %v1414, 1.999
      %v1423 = vmul.f32 %v1415, 1.999
      %v1424 = vmul.f32 %v1416, 1.999
      %v1425 = vsub.f32 %v1393, %v1417
      %v1426 = vsub.f32 %v1394, %v1418
      %v1427 = vsub.f32 %v1395, %v1419
      %v1428 = vsub.f32 %v1396, %v1420
      %v1429 = vsub.f32 %v1397, %v1421
      %v1430 = vsub.f32 %v1398, %v1422
      %v1431 = vsub.f32 %v1399, %v1423
      %v1432 = vsub.f32 %v1400, %v1424
      %v1433 = vadd.f32 %v1425, %v1297
      %v1434 = vadd.f32 %v1426, %v1298
      %v1435 = vadd.f32 %v1427, %v1299
      %v1436 = vadd.f32 %v1428, %v1300
      %v1437 = vadd.f32 %v1429, %v1301
      %v1438 = vadd.f32 %v1430, %v1302
      %v1439 = vadd.f32 %v1431, %v1303
      %v1440 = vadd.f32 %v1432, %v1304
      %v1441 = vmul.f32 %v1297, 3.0
      %v1442 = vmul.f32 %v1298, 3.0
      %v1443 = vmul.f32 %v1299, 3.0
      %v1444 = vmul.f32 %v1300, 3.0
      %v1445 = vmul.f32 %v1301, 3.0
      %v1446 = vmul.f32 %v1302, 3.0
      %v1447 = vmul.f32 %v1303, 3.0
      %v1448 = vmul.f32 %v1304, 3.0
      %v1449 = vmul.f32 %v1441, 0.5002501
      %v1450 = vmul.f32 %v1442, 0.5002501
      %v1451 = vmul.f32 %v1443, 0.5002501
      %v1452 = vmul.f32 %v1444, 0.5002501
      %v1453 = vmul.f32 %v1445, 0.5002501
      %v1454 = vmul.f32 %v1446, 0.5002501
      %v1455 = vmul.f32 %v1447, 0.5002501
      %v1456 = vmul.f32 %v1448, 0.5002501
      %v1457 = vfloor.f32 %v1449
      %v1458 = vfloor.f32 %v1450
      %v1459 = vfloor.f32 %v1451
      %v1460 = vfloor.f32 %v1452
      %v1461 = vfloor.f32 %v1453
      %v1462 = vfloor.f32 %v1454
      %v1463 = vfloor.f32 %v1455
      %v1464 = vfloor.f32 %v1456
      %v1465 = vmul.f32 %v1457, 1.999
      %v1466 = vmul.f32 %v1458, 1.999
      %v1467 = vmul.f32 %v1459, 1.999
      %v1468 = vmul.f32 %v1460, 1.999
      %v1469 = vmul.f32 %v1461, 1.999
      %v1470 = vmul.f32 %v1462, 1.999
      %v1471 = vmul.f32 %v1463, 1.999
      %v1472 = vmul.f32 %v1464, 1.999
      %v1473 = vsub.f32 %v1441, %v1465
      %v1474 = vsub.f32 %v1442, %v1466
      %v1475 = vsub.f32 %v1443, %v1467
      %v1476 = vsub.f32 %v1444, %v1468
      %v1477 = vsub.f32 %v1445, %v1469
      %v1478 = vsub.f32 %v1446, %v1470
      %v1479 = vsub.f32 %v1447, %v1471
      %v1480 = vsub.f32 %v1448, %v1472
      %v1481 = vadd.f32 %v1473, %v1297
      %v1482 = vadd.f32 %v1474, %v1298
      %v1483 = vadd.f32 %v1475, %v1299
      %v1484 = vadd.f32 %v1476, %v1300
      %v1485 = vadd.f32 %v1477, %v1301
      %v1486 = vadd.f32 %v1478, %v1302
      %v1487 = vadd.f32 %v1479, %v1303
      %v1488 = vadd.f32 %v1480, %v1304
      %v1489 = vmul.f32 %v1297, 4.0
      %v1490 = vmul.f32 %v1298, 4.0
      %v1491 = vmul.f32 %v1299, 4.0
      %v1492 = vmul.f32 %v1300, 4.0
      %v1493 = vmul.f32 %v1301, 4.0
      %v1494 = vmul.f32 %v1302, 4.0
      %v1495 = vmul.f32 %v1303, 4.0
      %v1496 = vmul.f32 %v1304, 4.0
      %v1497 = vmul.f32 %v1489, 0.5002501
      %v1498 = vmul.f32 %v1490, 0.5002501
      %v1499 = vmul.f32 %v1491, 0.5002501
      %v1500 = vmul.f32 %v1492, 0.5002501
      %v1501 = vmul.f32 %v1493, 0.5002501
      %v1502 = vmul.f32 %v1494, 0.5002501
      %v1503 = vmul.f32 %v1495, 0.5002501
      %v1504 = vmul.f32 %v1496, 0.5002501
      %v1505 = vfloor.f32 %v1497
      %v1506 = vfloor.f32 %v1498
      %v1507 = vfloor.f32 %v1499
      %v1508 = vfloor.f32 %v1500
      %v1509 = vfloor.f32 %v1501
      %v1510 = vfloor.f32 %v1502
      %v1511 = vfloor.f32 %v1503
      %v1512 = vfloor.f32 %v1504
      %v1513 = vmul.f32 %v1505, 1.999
      %v1514 = vmul.f32 %v1506, 1.999
      %v1515 = vmul.f32 %v1507, 1.999
      %v1516 = vmul.f32 %v1508, 1.999
      %v1517 = vmul.f32 %v1509, 1.999
      %v1518 = vmul.f32 %v1510, 1.999
      %v1519 = vmul.f32 %v1511, 1.999
      %v1520 = vmul.f32 %v1512, 1.999
      %v1521 = vsub.f32 %v1489, %v1513
      %v1522 = vsub.f32 %v1490, %v1514
      %v1523 = vsub.f32 %v1491, %v1515
      %v1524 = vsub.f32 %v1492, %v1516
      %v1525 = vsub.f32 %v1493, %v1517
      %v1526 = vsub.f32 %v1494, %v1518
      %v1527 = vsub.f32 %v1495, %v1519
      %v1528 = vsub.f32 %v1496, %v1520
      %v1529 = vadd.f32 %v1521, %v1297
      %v1530 = vadd.f32 %v1522, %v1298
      %v1531 = vadd.f32 %v1523, %v1299
      %v1532 = vadd.f32 %v1524, %v1300
      %v1533 = vadd.f32 %v1525, %v1301
      %v1534 = vadd.f32 %v1526, %v1302
      %v1535 = vadd.f32 %v1527, %v1303
      %v1536 = vadd.f32 %v1528, %v1304
      %v1537 = vmul.f32 %v1297, 5.0
      %v1538 = vmul.f32 %v1298, 5.0
      %v1539 = vmul.f32 %v1299, 5.0
      %v1540 = vmul.f32 %v1300, 5.0
      %v1541 = vmul.f32 %v1301, 5.0
      %v1542 = vmul.f32 %v1302, 5.0
      %v1543 = vmul.f32 %v1303, 5.0
      %v1544 = vmul.f32 %v1304, 5.0
      %v1545 = vmul.f32 %v1537, 0.5002501
      %v1546 = vmul.f32 %v1538, 0.5002501
      %v1547 = vmul.f32 %v1539, 0.5002501
      %v1548 = vmul.f32 %v1540, 0.5002501
      %v1549 = vmul.f32 %v1541, 0.5002501
      %v1550 = vmul.f32 %v1542, 0.5002501
      %v1551 = vmul.f32 %v1543, 0.5002501
      %v1552 = vmul.f32 %v1544, 0.5002501
      %v1553 = vfloor.f32 %v1545
      %v1554 = vfloor.f32 %v1546
      %v1555 = vfloor.f32 %v1547
      %v1556 = vfloor.f32 %v1548
      %v1557 = vfloor.f32 %v1549
      %v1558 = vfloor.f32 %v1550
      %v1559 = vfloor.f32 %v1551
      %v1560 = vfloor.f32 %v1552
      %v1561 = vmul.f32 %v1553, 1.999
      %v1562 = vmul.f32 %v1554, 1.999
      %v1563 = vmul.f32 %v1555, 1.999
      %v1564 = vmul.f32 %v1556, 1.999
      %v1565 = vmul.f32 %v1557, 1.999
      %v1566 = vmul.f32 %v1558, 1.999
      %v1567 = vmul.f32 %v1559, 1.999
      %v1568 = vmul.f32 %v1560, 1.999
      %v1569 = vsub.f32 %v1537, %v1561
      %v1570 = vsub.f32 %v1538, %v1562
      %v1571 = vsub.f32 %v1539, %v1563
      %v1572 = vsub.f32 %v1540, %v1564
      %v1573 = vsub.f32 %v1541, %v1565
      %v1574 = vsub.f32 %v1542, %v1566
      %v1575 = vsub.f32 %v1543, %v1567
      %v1576 = vsub.f32 %v1544, %v1568
      %v1577 = vadd.f32 %v1569, %v1297
      %v1578 = vadd.f32 %v1570, %v1298
      %v1579 = vadd.f32 %v1571, %v1299
      %v1580 = vadd.f32 %v1572, %v1300
      %v1581 = vadd.f32 %v1573, %v1301
      %v1582 = vadd.f32 %v1574, %v1302
      %v1583 = vadd.f32 %v1575, %v1303
      %v1584 = vadd.f32 %v1576, %v1304
      %v1585 = vmul.f32 %v1297, 6.0
      %v1586 = vmul.f32 %v1298, 6.0
      %v1587 = vmul.f32 %v1299, 6.0
      %v1588 = vmul.f32 %v1300, 6.0
      %v1589 = vmul.f32 %v1301, 6.0
      %v1590 = vmul.f32 %v1302, 6.0
      %v1591 = vmul.f32 %v1303, 6.0
      %v1592 = vmul.f32 %v1304, 6.0
      %v1593 = vmul.f32 %v1585, 0.5002501
      %v1594 = vmul.f32 %v1586, 0.5002501
      %v1595 = vmul.f32 %v1587, 0.5002501
      %v1596 = vmul.f32 %v1588, 0.5002501
      %v1597 = vmul.f32 %v1589, 0.5002501
      %v1598 = vmul.f32 %v1590, 0.5002501
      %v1599 = vmul.f32 %v1591, 0.5002501
      %v1600 = vmul.f32 %v1592, 0.5002501
      %v1601 = vfloor.f32 %v1593
      %v1602 = vfloor.f32 %v1594
      %v1603 = vfloor.f32 %v1595
      %v1604 = vfloor.f32 %v1596
      %v1605 = vfloor.f32 %v1597
      %v1606 = vfloor.f32 %v1598
      %v1607 = vfloor.f32 %v1599
      %v1608 = vfloor.f32 %v1600
      %v1609 = vmul.f32 %v1601, 1.999
      %v1610 = vmul.f32 %v1602, 1.999
      %v1611 = vmul.f32 %v1603, 1.999
      %v1612 = vmul.f32 %v1604, 1.999
      %v1613 = vmul.f32 %v1605, 1.999
      %v1614 = vmul.f32 %v1606, 1.999
      %v1615 = vmul.f32 %v1607, 1.999
      %v1616 = vmul.f32 %v1608, 1.999
      %v1617 = vsub.f32 %v1585, %v1609
      %v1618 = vsub.f32 %v1586, %v1610
      %v1619 = vsub.f32 %v1587, %v1611
      %v1620 = vsub.f32 %v1588, %v1612
      %v1621 = vsub.f32 %v1589, %v1613
      %v1622 = vsub.f32 %v1590, %v1614
      %v1623 = vsub.f32 %v1591, %v1615
      %v1624 = vsub.f32 %v1592, %v1616
      %v1625 = vadd.f32 %v1617, %v1297
      %v1626 = vadd.f32 %v1618, %v1298
      %v1627 = vadd.f32 %v1619, %v1299
      %v1628 = vadd.f32 %v1620, %v1300
      %v1629 = vadd.f32 %v1621, %v1301
      %v1630 = vadd.f32 %v1622, %v1302
      %v1631 = vadd.f32 %v1623, %v1303
      %v1632 = vadd.f32 %v1624, %v1304
      %v1633 = vmul.f32 %v1297, 7.0
      %v1634 = vmul.f32 %v1298, 7.0
      %v1635 = vmul.f32 %v1299, 7.0
      %v1636 = vmul.f32 %v1300, 7.0
      %v1637 = vmul.f32 %v1301, 7.0
      %v1638 = vmul.f32 %v1302, 7.0
      %v1639 = vmul.f32 %v1303, 7.0
      %v1640 = vmul.f32 %v1304, 7.0
      %v1641 = vmul.f32 %v1633, 0.5002501
      %v1642 = vmul.f32 %v1634, 0.5002501
      %v1643 = vmul.f32 %v1635, 0.5002501
      %v1644 = vmul.f32 %v1636, 0.5002501
      %v1645 = vmul.f32 %v1637, 0.5002501
      %v1646 = vmul.f32 %v1638, 0.5002501
      %v1647 = vmul.f32 %v1639, 0.5002501
      %v1648 = vmul.f32 %v1640, 0.5002501
      %v1649 = vfloor.f32 %v1641
      %v1650 = vfloor.f32 %v1642
      %v1651 = vfloor.f32 %v1643
      %v1652 = vfloor.f32 %v1644
      %v1653 = vfloor.f32 %v1645
      %v1654 = vfloor.f32 %v1646
      %v1655 = vfloor.f32 %v1647
      %v1656 = vfloor.f32 %v1648
      %v1657 = vmul.f32 %v1649, 1.999
      %v1658 = vmul.f32 %v1650, 1.999
      %v1659 = vmul.f32 %v1651, 1.999
      %v1660 = vmul.f32 %v1652, 1.999
      %v1661 = vmul.f32 %v1653, 1.999
      %v1662 = vmul.f32 %v1654, 1.999
      %v1663 = vmul.f32 %v1655, 1.999
      %v1664 = vmul.f32 %v1656, 1.999
      %v1665 = vsub.f32 %v1633, %v1657
      %v1666 = vsub.f32 %v1634, %v1658
      %v1667 = vsub.f32 %v1635, %v1659
      %v1668 = vsub.f32 %v1636, %v1660
      %v1669 = vsub.f32 %v1637, %v1661
      %v1670 = vsub.f32 %v1638, %v1662
      %v1671 = vsub.f32 %v1639, %v1663
      %v1672 = vsub.f32 %v1640, %v1664
      %v1673 = vadd.f32 %v1665, %v1297
      %v1674 = vadd.f32 %v1666, %v1298
      %v1675 = vadd.f32 %v1667, %v1299
      %v1676 = vadd.f32 %v1668, %v1300
      %v1677 = vadd.f32 %v1669, %v1301
      %v1678 = vadd.f32 %v1670, %v1302
      %v1679 = vadd.f32 %v1671, %v1303
      %v1680 = vadd.f32 %v1672, %v1304
      %vm1681 = vcmp.ge.f32.partialorder %v1345, 1.999
      %vm1682 = vcmp.ge.f32.partialorder %v1346, 1.999
      %vm1683 = vcmp.ge.f32.partialorder %v1347, 1.999
      %vm1684 = vcmp.ge.f32.partialorder %v1348, 1.999
      %vm1685 = vcmp.ge.f32.partialorder %v1349, 1.999
      %vm1686 = vcmp.ge.f32.partialorder %v1350, 1.999
      %vm1687 = vcmp.ge.f32.partialorder %v1351, 1.999
      %vm1688 = vcmp.ge.f32.partialorder %v1352, 1.999
      %vm1689 = vcmp.ge.f32.partialorder %v1385, 1.999
      %vm1690 = vcmp.ge.f32.partialorder %v1386, 1.999
      %vm1691 = vcmp.ge.f32.partialorder %v1387, 1.999
      %vm1692 = vcmp.ge.f32.partialorder %v1388, 1.999
      %vm1693 = vcmp.ge.f32.partialorder %v1389, 1.999
      %vm1694 = vcmp.ge.f32.partialorder %v1390, 1.999
      %vm1695 = vcmp.ge.f32.partialorder %v1391, 1.999
      %vm1696 = vcmp.ge.f32.partialorder %v1392, 1.999
      %vm1697 = vcmp.ge.f32.partialorder %v1433, 1.999
      %vm1698 = vcmp.ge.f32.partialorder %v1434, 1.999
      %vm1699 = vcmp.ge.f32.partialorder %v1435, 1.999
      %vm1700 = vcmp.ge.f32.partialorder %v1436, 1.999
      %vm1701 = vcmp.ge.f32.partialorder %v1437, 1.999
      %vm1702 = vcmp.ge.f32.partialorder %v1438, 1.999
      %vm1703 = vcmp.ge.f32.partialorder %v1439, 1.999
      %vm1704 = vcmp.ge.f32.partialorder %v1440, 1.999
      %vm1705 = vcmp.ge.f32.partialorder %v1481, 1.999
      %vm1706 = vcmp.ge.f32.partialorder %v1482, 1.999
      %vm1707 = vcmp.ge.f32.partialorder %v1483, 1.999
      %vm1708 = vcmp.ge.f32.partialorder %v1484, 1.999
      %vm1709 = vcmp.ge.f32.partialorder %v1485, 1.999
      %vm1710 = vcmp.ge.f32.partialorder %v1486, 1.999
      %vm1711 = vcmp.ge.f32.partialorder %v1487, 1.999
      %vm1712 = vcmp.ge.f32.partialorder %v1488, 1.999
      %vm1713 = vcmp.ge.f32.partialorder %v1529, 1.999
      %vm1714 = vcmp.ge.f32.partialorder %v1530, 1.999
      %vm1715 = vcmp.ge.f32.partialorder %v1531, 1.999
      %vm1716 = vcmp.ge.f32.partialorder %v1532, 1.999
      %vm1717 = vcmp.ge.f32.partialorder %v1533, 1.999
      %vm1718 = vcmp.ge.f32.partialorder %v1534, 1.999
      %vm1719 = vcmp.ge.f32.partialorder %v1535, 1.999
      %vm1720 = vcmp.ge.f32.partialorder %v1536, 1.999
      %vm1721 = vcmp.ge.f32.partialorder %v1577, 1.999
      %vm1722 = vcmp.ge.f32.partialorder %v1578, 1.999
      %vm1723 = vcmp.ge.f32.partialorder %v1579, 1.999
      %vm1724 = vcmp.ge.f32.partialorder %v1580, 1.999
      %vm1725 = vcmp.ge.f32.partialorder %v1581, 1.999
      %vm1726 = vcmp.ge.f32.partialorder %v1582, 1.999
      %vm1727 = vcmp.ge.f32.partialorder %v1583, 1.999
      %vm1728 = vcmp.ge.f32.partialorder %v1584, 1.999
      %vm1729 = vcmp.ge.f32.partialorder %v1625, 1.999
      %vm1730 = vcmp.ge.f32.partialorder %v1626, 1.999
      %vm1731 = vcmp.ge.f32.partialorder %v1627, 1.999
      %vm1732 = vcmp.ge.f32.partialorder %v1628, 1.999
      %vm1733 = vcmp.ge.f32.partialorder %v1629, 1.999
      %vm1734 = vcmp.ge.f32.partialorder %v1630, 1.999
      %vm1735 = vcmp.ge.f32.partialorder %v1631, 1.999
      %vm1736 = vcmp.ge.f32.partialorder %v1632, 1.999
      %vm1737 = vcmp.ge.f32.partialorder %v1673, 1.999
      %vm1738 = vcmp.ge.f32.partialorder %v1674, 1.999
      %vm1739 = vcmp.ge.f32.partialorder %v1675, 1.999
      %vm1740 = vcmp.ge.f32.partialorder %v1676, 1.999
      %vm1741 = vcmp.ge.f32.partialorder %v1677, 1.999
      %vm1742 = vcmp.ge.f32.partialorder %v1678, 1.999
      %vm1743 = vcmp.ge.f32.partialorder %v1679, 1.999
      %vm1744 = vcmp.ge.f32.partialorder %v1680, 1.999
      %v1745 = vsel %vm1681, 1, 0
      %v1746 = vsel %vm1682, 1, 0
      %v1747 = vsel %vm1683, 1, 0
      %v1748 = vsel %vm1684, 1, 0
      %v1749 = vsel %vm1685, 1, 0
      %v1750 = vsel %vm1686, 1, 0
      %v1751 = vsel %vm1687, 1, 0
      %v1752 = vsel %vm1688, 1, 0
      %v1753 = vsel %vm1689, 1, 0
      %v1754 = vsel %vm1690, 1, 0
      %v1755 = vsel %vm1691, 1, 0
      %v1756 = vsel %vm1692, 1, 0
      %v1757 = vsel %vm1693, 1, 0
      %v1758 = vsel %vm1694, 1, 0
      %v1759 = vsel %vm1695, 1, 0
      %v1760 = vsel %vm1696, 1, 0
      %v1761 = vsel %vm1697, 1, 0
      %v1762 = vsel %vm1698, 1, 0
      %v1763 = vsel %vm1699, 1, 0
      %v1764 = vsel %vm1700, 1, 0
      %v1765 = vsel %vm1701, 1, 0
      %v1766 = vsel %vm1702, 1, 0
      %v1767 = vsel %vm1703, 1, 0
      %v1768 = vsel %vm1704, 1, 0
      %v1769 = vsel %vm1705, 1, 0
      %v1770 = vsel %vm1706, 1, 0
      %v1771 = vsel %vm1707, 1, 0
      %v1772 = vsel %vm1708, 1, 0
      %v1773 = vsel %vm1709, 1, 0
      %v1774 = vsel %vm1710, 1, 0
      %v1775 = vsel %vm1711, 1, 0
      %v1776 = vsel %vm1712, 1, 0
      %v1777 = vsel %vm1713, 1, 0
      %v1778 = vsel %vm1714, 1, 0
      %v1779 = vsel %vm1715, 1, 0
      %v1780 = vsel %vm1716, 1, 0
      %v1781 = vsel %vm1717, 1, 0
      %v1782 = vsel %vm1718, 1, 0
      %v1783 = vsel %vm1719, 1, 0
      %v1784 = vsel %vm1720, 1, 0
      %v1785 = vsel %vm1721, 1, 0
      %v1786 = vsel %vm1722, 1, 0
      %v1787 = vsel %vm1723, 1, 0
      %v1788 = vsel %vm1724, 1, 0
      %v1789 = vsel %vm1725, 1, 0
      %v1790 = vsel %vm1726, 1, 0
      %v1791 = vsel %vm1727, 1, 0
      %v1792 = vsel %vm1728, 1, 0
      %v1793 = vsel %vm1729, 1, 0
      %v1794 = vsel %vm1730, 1, 0
      %v1795 = vsel %vm1731, 1, 0
      %v1796 = vsel %vm1732, 1, 0
      %v1797 = vsel %vm1733, 1, 0
      %v1798 = vsel %vm1734, 1, 0
      %v1799 = vsel %vm1735, 1, 0
      %v1800 = vsel %vm1736, 1, 0
      %v1801 = vsel %vm1737, 1, 0
      %v1802 = vsel %vm1738, 1, 0
      %v1803 = vsel %vm1739, 1, 0
      %v1804 = vsel %vm1740, 1, 0
      %v1805 = vsel %vm1741, 1, 0
      %v1806 = vsel %vm1742, 1, 0
      %v1807 = vsel %vm1743, 1, 0
      %v1808 = vsel %vm1744, 1, 0
      %v1809 = vcvt.s32.f32 %v1745
      %v1810 = vcvt.s32.f32 %v1746
      %v1811 = vcvt.s32.f32 %v1747
      %v1812 = vcvt.s32.f32 %v1748
      %v1813 = vcvt.s32.f32 %v1749
      %v1814 = vcvt.s32.f32 %v1750
      %v1815 = vcvt.s32.f32 %v1751
      %v1816 = vcvt.s32.f32 %v1752
      %v1817 = vcvt.s32.f32 %v1753
      %v1818 = vcvt.s32.f32 %v1754
      %v1819 = vcvt.s32.f32 %v1755
      %v1820 = vcvt.s32.f32 %v1756
      %v1821 = vcvt.s32.f32 %v1757
      %v1822 = vcvt.s32.f32 %v1758
      %v1823 = vcvt.s32.f32 %v1759
      %v1824 = vcvt.s32.f32 %v1760
      %v1825 = vcvt.s32.f32 %v1761
      %v1826 = vcvt.s32.f32 %v1762
      %v1827 = vcvt.s32.f32 %v1763
      %v1828 = vcvt.s32.f32 %v1764
      %v1829 = vcvt.s32.f32 %v1765
      %v1830 = vcvt.s32.f32 %v1766
      %v1831 = vcvt.s32.f32 %v1767
      %v1832 = vcvt.s32.f32 %v1768
      %v1833 = vcvt.s32.f32 %v1769
      %v1834 = vcvt.s32.f32 %v1770
      %v1835 = vcvt.s32.f32 %v1771
      %v1836 = vcvt.s32.f32 %v1772
      %v1837 = vcvt.s32.f32 %v1773
      %v1838 = vcvt.s32.f32 %v1774
      %v1839 = vcvt.s32.f32 %v1775
      %v1840 = vcvt.s32.f32 %v1776
      %v1841 = vcvt.s32.f32 %v1777
      %v1842 = vcvt.s32.f32 %v1778
      %v1843 = vcvt.s32.f32 %v1779
      %v1844 = vcvt.s32.f32 %v1780
      %v1845 = vcvt.s32.f32 %v1781
      %v1846 = vcvt.s32.f32 %v1782
      %v1847 = vcvt.s32.f32 %v1783
      %v1848 = vcvt.s32.f32 %v1784
      %v1849 = vcvt.s32.f32 %v1785
      %v1850 = vcvt.s32.f32 %v1786
      %v1851 = vcvt.s32.f32 %v1787
      %v1852 = vcvt.s32.f32 %v1788
      %v1853 = vcvt.s32.f32 %v1789
      %v1854 = vcvt.s32.f32 %v1790
      %v1855 = vcvt.s32.f32 %v1791
      %v1856 = vcvt.s32.f32 %v1792
      %v1857 = vcvt.s32.f32 %v1793
      %v1858 = vcvt.s32.f32 %v1794
      %v1859 = vcvt.s32.f32 %v1795
      %v1860 = vcvt.s32.f32 %v1796
      %v1861 = vcvt.s32.f32 %v1797
      %v1862 = vcvt.s32.f32 %v1798
      %v1863 = vcvt.s32.f32 %v1799
      %v1864 = vcvt.s32.f32 %v1800
      %v1865 = vcvt.s32.f32 %v1801
      %v1866 = vcvt.s32.f32 %v1802
      %v1867 = vcvt.s32.f32 %v1803
      %v1868 = vcvt.s32.f32 %v1804
      %v1869 = vcvt.s32.f32 %v1805
      %v1870 = vcvt.s32.f32 %v1806
      %v1871 = vcvt.s32.f32 %v1807
      %v1872 = vcvt.s32.f32 %v1808
      %v1873 = vpack.c.bf16 %v1810, %v1809
      %v1874 = vpack.c.bf16 %v1812, %v1811
      %v1875 = vpack.c.bf16 %v1814, %v1813
      %v1876 = vpack.c.bf16 %v1816, %v1815
      %v1877 = vpack.c.bf16 %v1818, %v1817
      %v1878 = vpack.c.bf16 %v1820, %v1819
      %v1879 = vpack.c.bf16 %v1822, %v1821
      %v1880 = vpack.c.bf16 %v1824, %v1823
      %v1881 = vpack.c.bf16 %v1826, %v1825
      %v1882 = vpack.c.bf16 %v1828, %v1827
      %v1883 = vpack.c.bf16 %v1830, %v1829
      %v1884 = vpack.c.bf16 %v1832, %v1831
      %v1885 = vpack.c.bf16 %v1834, %v1833
      %v1886 = vpack.c.bf16 %v1836, %v1835
      %v1887 = vpack.c.bf16 %v1838, %v1837
      %v1888 = vpack.c.bf16 %v1840, %v1839
      %v1889 = vpack.c.bf16 %v1842, %v1841
      %v1890 = vpack.c.bf16 %v1844, %v1843
      %v1891 = vpack.c.bf16 %v1846, %v1845
      %v1892 = vpack.c.bf16 %v1848, %v1847
      %v1893 = vpack.c.bf16 %v1850, %v1849
      %v1894 = vpack.c.bf16 %v1852, %v1851
      %v1895 = vpack.c.bf16 %v1854, %v1853
      %v1896 = vpack.c.bf16 %v1856, %v1855
      %v1897 = vpack.c.bf16 %v1858, %v1857
      %v1898 = vpack.c.bf16 %v1860, %v1859
      %v1899 = vpack.c.bf16 %v1862, %v1861
      %v1900 = vpack.c.bf16 %v1864, %v1863
      %v1901 = vpack.c.bf16 %v1866, %v1865
      %v1902 = vpack.c.bf16 %v1868, %v1867
      %v1903 = vpack.c.bf16 %v1870, %v1869
      %v1904 = vpack.c.bf16 %v1872, %v1871
      %v1937 = vunpack.c.l.b16 %v1873
      %v1938 = vunpack.c.h.b16 %v1873
      %v1939 = vunpack.c.l.b16 %v1874
      %v1940 = vunpack.c.h.b16 %v1874
      %v1941 = vunpack.c.l.b16 %v1875
      %v1942 = vunpack.c.h.b16 %v1875
      %v1943 = vunpack.c.l.b16 %v1876
      %v1944 = vunpack.c.h.b16 %v1876
      %v1945 = vunpack.c.l.b16 %v1877
      %v1946 = vunpack.c.h.b16 %v1877
      %v1947 = vunpack.c.l.b16 %v1878
      %v1948 = vunpack.c.h.b16 %v1878
      %v1949 = vunpack.c.l.b16 %v1879
      %v1950 = vunpack.c.h.b16 %v1879
      %v1951 = vunpack.c.l.b16 %v1880
      %v1952 = vunpack.c.h.b16 %v1880
      %v1953 = vunpack.c.l.b16 %v1881
      %v1954 = vunpack.c.h.b16 %v1881
      %v1955 = vunpack.c.l.b16 %v1882
      %v1956 = vunpack.c.h.b16 %v1882
      %v1957 = vunpack.c.l.b16 %v1883
      %v1958 = vunpack.c.h.b16 %v1883
      %v1959 = vunpack.c.l.b16 %v1884
      %v1960 = vunpack.c.h.b16 %v1884
      %v1961 = vunpack.c.l.b16 %v1885
      %v1962 = vunpack.c.h.b16 %v1885
      %v1963 = vunpack.c.l.b16 %v1886
      %v1964 = vunpack.c.h.b16 %v1886
      %v1965 = vunpack.c.l.b16 %v1887
      %v1966 = vunpack.c.h.b16 %v1887
      %v1967 = vunpack.c.l.b16 %v1888
      %v1968 = vunpack.c.h.b16 %v1888
      %v1969 = vunpack.c.l.b16 %v1889
      %v1970 = vunpack.c.h.b16 %v1889
      %v1971 = vunpack.c.l.b16 %v1890
      %v1972 = vunpack.c.h.b16 %v1890
      %v1973 = vunpack.c.l.b16 %v1891
      %v1974 = vunpack.c.h.b16 %v1891
      %v1975 = vunpack.c.l.b16 %v1892
      %v1976 = vunpack.c.h.b16 %v1892
      %v1977 = vunpack.c.l.b16 %v1893
      %v1978 = vunpack.c.h.b16 %v1893
      %v1979 = vunpack.c.l.b16 %v1894
      %v1980 = vunpack.c.h.b16 %v1894
      %v1981 = vunpack.c.l.b16 %v1895
      %v1982 = vunpack.c.h.b16 %v1895
      %v1983 = vunpack.c.l.b16 %v1896
      %v1984 = vunpack.c.h.b16 %v1896
      %v1985 = vunpack.c.l.b16 %v1897
      %v1986 = vunpack.c.h.b16 %v1897
      %v1987 = vunpack.c.l.b16 %v1898
      %v1988 = vunpack.c.h.b16 %v1898
      %v1989 = vunpack.c.l.b16 %v1899
      %v1990 = vunpack.c.h.b16 %v1899
      %v1991 = vunpack.c.l.b16 %v1900
      %v1992 = vunpack.c.h.b16 %v1900
      %v1993 = vunpack.c.l.b16 %v1901
      %v1994 = vunpack.c.h.b16 %v1901
      %v1995 = vunpack.c.l.b16 %v1902
      %v1996 = vunpack.c.h.b16 %v1902
      %v1997 = vunpack.c.l.b16 %v1903
      %v1998 = vunpack.c.h.b16 %v1903
      %v1999 = vunpack.c.l.b16 %v1904
      %v2000 = vunpack.c.h.b16 %v1904
      %v2001 = vpack.c.b16 %v1937, %v1937
      %v2002 = vpack.c.b16 %v1938, %v1938
      %v2003 = vpack.c.b16 %v1939, %v1939
      %v2004 = vpack.c.b16 %v1940, %v1940
      %v2005 = vpack.c.b16 %v1941, %v1941
      %v2006 = vpack.c.b16 %v1942, %v1942
      %v2007 = vpack.c.b16 %v1943, %v1943
      %v2008 = vpack.c.b16 %v1944, %v1944
      %v2009 = vpack.c.b16 %v1945, %v1945
      %v2010 = vpack.c.b16 %v1946, %v1946
      %v2011 = vpack.c.b16 %v1947, %v1947
      %v2012 = vpack.c.b16 %v1948, %v1948
      %v2013 = vpack.c.b16 %v1949, %v1949
      %v2014 = vpack.c.b16 %v1950, %v1950
      %v2015 = vpack.c.b16 %v1951, %v1951
      %v2016 = vpack.c.b16 %v1952, %v1952
      %v2017 = vpack.c.b16 %v1953, %v1953
      %v2018 = vpack.c.b16 %v1954, %v1954
      %v2019 = vpack.c.b16 %v1955, %v1955
      %v2020 = vpack.c.b16 %v1956, %v1956
      %v2021 = vpack.c.b16 %v1957, %v1957
      %v2022 = vpack.c.b16 %v1958, %v1958
      %v2023 = vpack.c.b16 %v1959, %v1959
      %v2024 = vpack.c.b16 %v1960, %v1960
      %v2025 = vpack.c.b16 %v1961, %v1961
      %v2026 = vpack.c.b16 %v1962, %v1962
      %v2027 = vpack.c.b16 %v1963, %v1963
      %v2028 = vpack.c.b16 %v1964, %v1964
      %v2029 = vpack.c.b16 %v1965, %v1965
      %v2030 = vpack.c.b16 %v1966, %v1966
      %v2031 = vpack.c.b16 %v1967, %v1967
      %v2032 = vpack.c.b16 %v1968, %v1968
      %v2033 = vpack.c.b16 %v1969, %v1969
      %v2034 = vpack.c.b16 %v1970, %v1970
      %v2035 = vpack.c.b16 %v1971, %v1971
      %v2036 = vpack.c.b16 %v1972, %v1972
      %v2037 = vpack.c.b16 %v1973, %v1973
      %v2038 = vpack.c.b16 %v1974, %v1974
      %v2039 = vpack.c.b16 %v1975, %v1975
      %v2040 = vpack.c.b16 %v1976, %v1976
      %v2041 = vpack.c.b16 %v1977, %v1977
      %v2042 = vpack.c.b16 %v1978, %v1978
      %v2043 = vpack.c.b16 %v1979, %v1979
      %v2044 = vpack.c.b16 %v1980, %v1980
      %v2045 = vpack.c.b16 %v1981, %v1981
      %v2046 = vpack.c.b16 %v1982, %v1982
      %v2047 = vpack.c.b16 %v1983, %v1983
      %v2048 = vpack.c.b16 %v1984, %v1984
      %v2049 = vpack.c.b16 %v1985, %v1985
      %v2050 = vpack.c.b16 %v1986, %v1986
      %v2051 = vpack.c.b16 %v1987, %v1987
      %v2052 = vpack.c.b16 %v1988, %v1988
      %v2053 = vpack.c.b16 %v1989, %v1989
      %v2054 = vpack.c.b16 %v1990, %v1990
      %v2055 = vpack.c.b16 %v1991, %v1991
      %v2056 = vpack.c.b16 %v1992, %v1992
      %v2057 = vpack.c.b16 %v1993, %v1993
      %v2058 = vpack.c.b16 %v1994, %v1994
      %v2059 = vpack.c.b16 %v1995, %v1995
      %v2060 = vpack.c.b16 %v1996, %v1996
      %v2061 = vpack.c.b16 %v1997, %v1997
      %v2062 = vpack.c.b16 %v1998, %v1998
      %v2063 = vpack.c.b16 %v1999, %v1999
      %v2064 = vpack.c.b16 %v2000, %v2000
      %vm2129 = vcmask 60416
      %2130 = vst.msk [vmem:[%s170] sm:$0xf] %vm2129, %v2001
      %2131 = vst.msk [vmem:[%s170 + $0x4] sm:$0xf] %vm2129, %v2002
      %2132 = vst.msk [vmem:[%s170 + $0x8] sm:$0xf] %vm2129, %v2003
      %2133 = vst.msk [vmem:[%s170 + $0xc] sm:$0xf] %vm2129, %v2004
      %2134 = vst.msk [vmem:[%s170 + $0x10] sm:$0xf] %vm2129, %v2005
      %2135 = vst.msk [vmem:[%s170 + $0x14] sm:$0xf] %vm2129, %v2006
      %2136 = vst.msk [vmem:[%s170 + $0x18] sm:$0xf] %vm2129, %v2007
      %2137 = vst.msk [vmem:[%s170 + $0x1c] sm:$0xf] %vm2129, %v2008
      %2138 = vst.msk [vmem:[%s170 + $0x20] sm:$0xf] %vm2129, %v2009
      %2139 = vst.msk [vmem:[%s170 + $0x24] sm:$0xf] %vm2129, %v2010
      %2140 = vst.msk [vmem:[%s170 + $0x28] sm:$0xf] %vm2129, %v2011
      %2141 = vst.msk [vmem:[%s170 + $0x2c] sm:$0xf] %vm2129, %v2012
      %2142 = vst.msk [vmem:[%s170 + $0x30] sm:$0xf] %vm2129, %v2013
      %2143 = vst.msk [vmem:[%s170 + $0x34] sm:$0xf] %vm2129, %v2014
      %2144 = vst.msk [vmem:[%s170 + $0x38] sm:$0xf] %vm2129, %v2015
      %2145 = vst.msk [vmem:[%s170 + $0x3c] sm:$0xf] %vm2129, %v2016
      %2146 = vst.msk [vmem:[%s170 + $0x40] sm:$0xf] %vm2129, %v2017
      %2147 = vst.msk [vmem:[%s170 + $0x44] sm:$0xf] %vm2129, %v2018
      %2148 = vst.msk [vmem:[%s170 + $0x48] sm:$0xf] %vm2129, %v2019
      %2149 = vst.msk [vmem:[%s170 + $0x4c] sm:$0xf] %vm2129, %v2020
      %2150 = vst.msk [vmem:[%s170 + $0x50] sm:$0xf] %vm2129, %v2021
      %2151 = vst.msk [vmem:[%s170 + $0x54] sm:$0xf] %vm2129, %v2022
      %2152 = vst.msk [vmem:[%s170 + $0x58] sm:$0xf] %vm2129, %v2023
      %2153 = vst.msk [vmem:[%s170 + $0x5c] sm:$0xf] %vm2129, %v2024
      %2154 = vst.msk [vmem:[%s170 + $0x60] sm:$0xf] %vm2129, %v2025
      %2155 = vst.msk [vmem:[%s170 + $0x64] sm:$0xf] %vm2129, %v2026
      %2156 = vst.msk [vmem:[%s170 + $0x68] sm:$0xf] %vm2129, %v2027
      %2157 = vst.msk [vmem:[%s170 + $0x6c] sm:$0xf] %vm2129, %v2028
      %2158 = vst.msk [vmem:[%s170 + $0x70] sm:$0xf] %vm2129, %v2029
      %2159 = vst.msk [vmem:[%s170 + $0x74] sm:$0xf] %vm2129, %v2030
      %2160 = vst.msk [vmem:[%s170 + $0x78] sm:$0xf] %vm2129, %v2031
      %2161 = vst.msk [vmem:[%s170 + $0x7c] sm:$0xf] %vm2129, %v2032
      %2162 = vst.msk [vmem:[%s170 + $0x80] sm:$0xf] %vm2129, %v2033
      %2163 = vst.msk [vmem:[%s170 + $0x84] sm:$0xf] %vm2129, %v2034
      %2164 = vst.msk [vmem:[%s170 + $0x88] sm:$0xf] %vm2129, %v2035
      %2165 = vst.msk [vmem:[%s170 + $0x8c] sm:$0xf] %vm2129, %v2036
      %2166 = vst.msk [vmem:[%s170 + $0x90] sm:$0xf] %vm2129, %v2037
      %2167 = vst.msk [vmem:[%s170 + $0x94] sm:$0xf] %vm2129, %v2038
      %2168 = vst.msk [vmem:[%s170 + $0x98] sm:$0xf] %vm2129, %v2039
      %2169 = vst.msk [vmem:[%s170 + $0x9c] sm:$0xf] %vm2129, %v2040
      %2170 = vst.msk [vmem:[%s170 + $0xa0] sm:$0xf] %vm2129, %v2041
      %2171 = vst.msk [vmem:[%s170 + $0xa4] sm:$0xf] %vm2129, %v2042
      %2172 = vst.msk [vmem:[%s170 + $0xa8] sm:$0xf] %vm2129, %v2043
      %2173 = vst.msk [vmem:[%s170 + $0xac] sm:$0xf] %vm2129, %v2044
      %2174 = vst.msk [vmem:[%s170 + $0xb0] sm:$0xf] %vm2129, %v2045
      %2175 = vst.msk [vmem:[%s170 + $0xb4] sm:$0xf] %vm2129, %v2046
      %2176 = vst.msk [vmem:[%s170 + $0xb8] sm:$0xf] %vm2129, %v2047
      %2177 = vst.msk [vmem:[%s170 + $0xbc] sm:$0xf] %vm2129, %v2048
      %2178 = vst.msk [vmem:[%s170 + $0xc0] sm:$0xf] %vm2129, %v2049
      %2179 = vst.msk [vmem:[%s170 + $0xc4] sm:$0xf] %vm2129, %v2050
      %2180 = vst.msk [vmem:[%s170 + $0xc8] sm:$0xf] %vm2129, %v2051
      %2181 = vst.msk [vmem:[%s170 + $0xcc] sm:$0xf] %vm2129, %v2052
      %2182 = vst.msk [vmem:[%s170 + $0xd0] sm:$0xf] %vm2129, %v2053
      %2183 = vst.msk [vmem:[%s170 + $0xd4] sm:$0xf] %vm2129, %v2054
      %2184 = vst.msk [vmem:[%s170 + $0xd8] sm:$0xf] %vm2129, %v2055
      %2185 = vst.msk [vmem:[%s170 + $0xdc] sm:$0xf] %vm2129, %v2056
      %2186 = vst.msk [vmem:[%s170 + $0xe0] sm:$0xf] %vm2129, %v2057
      %2187 = vst.msk [vmem:[%s170 + $0xe4] sm:$0xf] %vm2129, %v2058
      %2188 = vst.msk [vmem:[%s170 + $0xe8] sm:$0xf] %vm2129, %v2059
      %2189 = vst.msk [vmem:[%s170 + $0xec] sm:$0xf] %vm2129, %v2060
      %2190 = vst.msk [vmem:[%s170 + $0xf0] sm:$0xf] %vm2129, %v2061
      %2191 = vst.msk [vmem:[%s170 + $0xf4] sm:$0xf] %vm2129, %v2062
      %2192 = vst.msk [vmem:[%s170 + $0xf8] sm:$0xf] %vm2129, %v2063
      %2193 = vst.msk [vmem:[%s170 + $0xfc] sm:$0xf] %vm2129, %v2064
      %p2194 = scmp.lt.s32.totalorder %s14, 1
      %s2195 = scalar_select %p2194, %s14, 1
      %s2196 = smul.addr %s2195, 64
      %s2197 = smul.addr %s2196, 4
      %s2198 = scalar_lea.vmem %s3, %s2197
      // Predicated region
      $region33: #{repvggplus_block_forward.1} parent=31 // pred_check
        %p2199 = pneg %p100
      $region34: #{repvggplus_block_forward.1} parent=31 // pred_check_branch
        %2201 = sbr.rel (%p2199) target = $region36
      $region35: #{repvggplus_block_forward.1} parent=31 // pred_region
        _
      $region36: #{repvggplus_block_forward.1} parent=31 // pred_fallthru
        _
    $region32: #{repvggplus_block_forward.1} parent=5 // pred_fallthru
      _
    %p2202 = scmp.le.s32.totalorder 2, %s9
    // Predicated region
    $region37: #{repvggplus_block_forward.1} parent=5 // pred_check
      %p2203 = pneg %p2202
    $region38: #{repvggplus_block_forward.1} parent=5 // pred_check_branch
      %2205 = sbr.rel (%p2203) target = $region40
    $region39: #{repvggplus_block_forward.1} parent=5 // pred_region
      %s2206 = ssub.s32 %s9, 2
      // Predicated region
      $region41: #{repvggplus_block_forward.1} parent=39 // pred_check
        %p2207 = pneg %p106
      $region42: #{repvggplus_block_forward.1} parent=39 // pred_check_branch
        %2209 = sbr.rel (%p2207) target = $region44
      $region43: #{repvggplus_block_forward.1} parent=39 // pred_region
        %p2210 = scmp.lt.s32.totalorder %s15, 1
        %s2211 = scalar_select %p2210, %s15, 1
        %s2212 = smul.addr %s2211, 64
        %s2213 = smul.addr %s2212, 4
        %s2214 = scalar_lea.vmem %s3, %s2213
      $region44: #{repvggplus_block_forward.1} parent=39 // pred_fallthru
        _
    $region40: #{repvggplus_block_forward.1} parent=5 // pred_fallthru
      _
  $region6: #{repvggplus_block_forward.1} parent=0 // loop_footer
    %s13 = sadd.s32 1, %s9
  $region7: #{repvggplus_block_forward.1} parent=0 // loop_footer_branch
    %8 = sbr.rel target = $region3
  $region8: #{repvggplus_block_forward.1} parent=0 // loop_exit
    _

</llo_original>
